<compile_context>
chip_gen: v6e
topology: v6e:2x2x1
jax: 0.10.0
libtpu: 0.0.40
codegen_flags: <defaults>
</compile_context>

<pallas_src>
import functools
import math

import jax
import jax.numpy as jnp
from jax.experimental import pallas as pl
from jax.experimental.pallas import tpu as pltpu

GRID_SIZE = 5
SPLINE_ORDER = 3
GRID_RANGE = (-1.0, 1.0)
BN_EPS = 1e-5


# ---------------------------------------------------------------------------
# Fused Pallas kernel
# ---------------------------------------------------------------------------
def _kan_layer(x, dmat_ref, knrow_ref, wcat_ref, shift_ref, *, K, spline_order):
    """One KANLinear layer (eval mode), fully lane-packed.

    Lane layout: lane l = j*in + i holds (feature i, spline basis j).
    The uniform-grid Cox-de Boor denominators (k*h) are folded into the
    spline weights host-side, so the in-kernel recursion is mul/sub only.
    """
    in_f = x.shape[-1]
    W = K * in_f
    nd = spline_order + 2          # number of staggered (x - t[j+m]) tensors

    # All nd staggered difference tensors with ONE MXU matmul:
    #   dall[:, m*W + j*in + i] = x[:, i] - t[j + m]
    dall = jnp.dot(x, dmat_ref[...], preferred_element_type=jnp.float32)
    dall = dall - knrow_ref[...]
    D = [dall[:, m * W:(m + 1) * W] for m in range(nd)]       # (bn, W) each

    # degree-0 bases (staggered): indicator(t[j+m] <= x < t[j+m+1])
    ge = [d >= 0.0 for d in D]
    B = [(ge[m] & (~ge[m + 1])).astype(jnp.float32)
         for m in range(spline_order + 1)]

    # Cox-de Boor recursion without divisions; stagger m already holds basis
    # index j+m, so no lane roll is needed for the bases[j+1] term.
    for k in range(1, spline_order + 1):
        B = [D[m] * B[m] - D[m + k + 1] * B[m + 1]
             for m in range(spline_order + 1 - k)]
    # B[0][:, j*in + i] = (prod_k k*h) * B-spline basis_j(x_i)

    # One full-depth matmul: [spline bases | x*silu(x)] @ [wsp ; wb]
    lhs = jnp.concatenate([B[0], x * jax.nn.sigmoid(x)], axis=-1)  # (bn, W+in)
    acc = jnp.dot(lhs, wcat_ref[...], preferred_element_type=jnp.float32)
    return acc + shift_ref[...]        # BN shift (BN scale already in wcat)


def kan_mlp_kernel(*refs, n_kan_layers, K, spline_order):
    """Fully fused forward: [KANLinear]*n -> Linear. Intermediates stay in VMEM.

    refs layout: x, (dmat, knrow, wcat, shift) * n_kan_layers, w_mlp, b_mlp, out
    """
    x_ref, o_ref = refs[0], refs[-1]
    x = x_ref[...].astype(jnp.float32)

    idx = 1
    for _ in range(n_kan_layers):
        dmat_ref, knrow_ref, wcat_ref, shift_ref = refs[idx:idx + 4]
        idx += 4
        x = _kan_layer(x, dmat_ref, knrow_ref, wcat_ref, shift_ref,
                       K=K, spline_order=spline_order)

    wm_ref, bm_ref = refs[idx], refs[idx + 1]
    y = jnp.dot(x, wm_ref[...], preferred_element_type=jnp.float32) + bm_ref[...]
    o_ref[...] = y.astype(o_ref.dtype)


# ---------------------------------------------------------------------------
# Wrapper
# ---------------------------------------------------------------------------
def _full_spec(arr):
    """Whole-array block, constant block index (stays VMEM-resident)."""
    nd = arr.ndim
    return pl.BlockSpec(arr.shape, lambda i, _nd=nd: (0,) * _nd)


def kan_mlp_forward(x, params, *, block_n=1024):
    """Single fused pallas_call over a 1-D ("parallel") batch grid."""
    N, in0 = x.shape
    kan_layers = params["kan_layers"]
    mlp = params["mlp"]
    out_f = mlp["w"].shape[1]

    # Batch tiling: one block if small, else block_n-row blocks (multiple of 8).
    if N <= block_n:
        bn, n_pad = N, N
    else:
        bn = block_n
        n_pad = ((N + bn - 1) // bn) * bn
    xp = x if n_pad == N else jnp.pad(x, ((0, n_pad - N), (0, 0)))

    inputs = [xp]
    in_specs = [pl.BlockSpec((bn, in0), lambda i: (i, 0))]
    for p in kan_layers:
        for name in ("dmat", "knrow", "wcat", "shift"):
            inputs.append(p[name])
            in_specs.append(_full_spec(p[name]))
    inputs += [mlp["w"], mlp["b"]]
    in_specs += [_full_spec(mlp["w"]), _full_spec(mlp["b"])]

    kernel = functools.partial(
        kan_mlp_kernel, n_kan_layers=len(kan_layers),
        K=GRID_SIZE + SPLINE_ORDER, spline_order=SPLINE_ORDER)

    out = pl.pallas_call(
        kernel,
        out_shape=jax.ShapeDtypeStruct((n_pad, out_f), jnp.float32),
        grid=(n_pad // bn,),
        in_specs=in_specs,
        out_specs=pl.BlockSpec((bn, out_f), lambda i: (i, 0)),
        compiler_params=pltpu.CompilerParams(
            dimension_semantics=("parallel",),
            vmem_limit_bytes=64 * 1024 * 1024),
    )(*inputs)

    return out[:N]


# ---------------------------------------------------------------------------
# Deterministic parameter construction (synthetic, matches module shapes)
# ---------------------------------------------------------------------------
def make_kan_layer_params(key, in_f, out_f):
    K = GRID_SIZE + SPLINE_ORDER                       # 8
    G = GRID_SIZE + 2 * SPLINE_ORDER + 1               # 12
    ND = SPLINE_ORDER + 2                              # 5 staggered knot rows
    W = K * in_f
    h = (GRID_RANGE[1] - GRID_RANGE[0]) / GRID_SIZE
    grid_1d = (jnp.arange(-SPLINE_ORDER, GRID_SIZE + SPLINE_ORDER + 1,
                          dtype=jnp.float32) * h + GRID_RANGE[0])   # (G,)
    grid = jnp.broadcast_to(grid_1d, (in_f, G))                      # (in, G)

    k1, k2, k3 = jax.random.split(key, 3)
    bound = 1.0 / math.sqrt(in_f)
    base_weight = jax.random.uniform(k1, (out_f, in_f), jnp.float32,
                                     -bound, bound)
    spline_weight = jax.random.uniform(k2, (out_f, in_f, K), jnp.float32,
                                       -0.1, 0.1)
    spline_scaler = jax.random.uniform(k3, (out_f, in_f), jnp.float32,
                                       -bound, bound)

    # BatchNorm1d at init (eval mode): gamma=1, beta=0, mean=0, var=1
    gamma = jnp.ones((out_f,), jnp.float32)
    beta = jnp.zeros((out_f,), jnp.float32)
    running_mean = jnp.zeros((out_f,), jnp.float32)
    running_var = jnp.ones((out_f,), jnp.float32)
    bn_scale = gamma / jnp.sqrt(running_var + BN_EPS)
    bn_shift = beta - running_mean * bn_scale

    # ---- kernel-friendly packing (eval-mode only folds) -------------------
    # Deferred Cox-de Boor denominators for the uniform grid: prod_k (k*h).
    denom = 1.0
    for k in range(1, SPLINE_ORDER + 1):
        denom *= k * h
    R = 1.0 / denom

    sw = spline_weight * spline_scaler[..., None]                   # (out,in,K)
    # basis-major rows: row j*in + i  ->  sw[o, i, j]
    wsp = jnp.transpose(sw, (2, 1, 0)).reshape(W, out_f)            # (W, out)
    wb = base_weight.T                                              # (in, out)
    wcat = jnp.concatenate([wsp * R, wb], axis=0) * bn_scale[None, :]
    shift = bn_shift.reshape(1, out_f)

    # 0/1 replication matrix + per-lane knot row for the staggered differences
    eye = jnp.eye(in_f, dtype=jnp.float32)
    dmat = jnp.tile(eye, (1, K * ND))                               # (in, ND*W)
    knrow = jnp.concatenate(
        [jnp.repeat(grid_1d[m:m + K], in_f) for m in range(ND)]
    ).reshape(1, ND * W)

    packed = dict(dmat=dmat, knrow=knrow, wcat=wcat, shift=shift)
    raw = dict(grid=grid, base_weight=base_weight,
               spline_weight=spline_weight, spline_scaler=spline_scaler,
               bn_scale=bn_scale, bn_shift=bn_shift)
    return packed, raw


def make_mlp_params(key, in_f, out_f):
    k1, k2 = jax.random.split(key)
    bound = 1.0 / math.sqrt(in_f)
    w = jax.random.uniform(k1, (out_f, in_f), jnp.float32, -bound, bound)
    b = jax.random.uniform(k2, (out_f,), jnp.float32, -bound, bound)
    packed = dict(w=w.T, b=b.reshape(1, out_f))       # lane-minimal (32,8)/(1,8)
    raw = dict(w=w, b=b)
    return packed, raw


# ---------------------------------------------------------------------------
# Pure-JAX reference (mirrors the PyTorch forward, eval mode)
# ---------------------------------------------------------------------------
def b_splines_ref(x, grid):
    xe = x[..., None]                                                # (N, in, 1)
    bases = ((xe >= grid[:, :-1]) & (xe < grid[:, 1:])).astype(x.dtype)
    for k in range(1, SPLINE_ORDER + 1):
        bases = ((xe - grid[:, :-(k + 1)]) /
                 (grid[:, k:-1] - grid[:, :-(k + 1)]) * bases[..., :-1]
                 + (grid[:, k + 1:] - xe) /
                 (grid[:, k + 1:] - grid[:, 1:-k]) * bases[..., 1:])
    return bases                                                     # (N, in, K)


def kan_linear_ref(x, raw):
    N = x.shape[0]
    out_f = raw["base_weight"].shape[0]
    scaled_w = raw["spline_weight"] * raw["spline_scaler"][..., None]
    spline_out = b_splines_ref(x, raw["grid"]).reshape(N, -1) @ \
        scaled_w.reshape(out_f, -1).T
    base_out = (x * jax.nn.sigmoid(x)) @ raw["base_weight"].T
    y = base_out + spline_out
    return y * raw["bn_scale"] + raw["bn_shift"]


def kan_mlp_ref(x, raw_params):
    for raw in raw_params["kan_layers"]:
        x = kan_linear_ref(x, raw)
    x = x @ raw_params["mlp"]["w"].T + raw_params["mlp"]["b"]
    return x


# ---------------------------------------------------------------------------
if __name__ == "__main__":
    # layers_hidden = [16, 32, 32, 8]
    #   -> KAN part: KANLinear(16->32), KANLinear(32->32)   (+ Dropout = id)
    #   -> MLP part: Linear(32->8)
    layers_hidden = [16, 32, 32, 8]
    batch = 8

    key = jax.random.PRNGKey(0)
    kx, *kparams = jax.random.split(key, 2 + len(layers_hidden))

    kan_hiddens = layers_hidden[:-1]
    mlp_hiddens = layers_hidden[-2:]

    packed_layers, raw_layers = [], []
    ki = 0
    for in_f, out_f in zip(kan_hiddens, kan_hiddens[1:]):
        p, r = make_kan_layer_params(kparams[ki], in_f, out_f)
        packed_layers.append(p)
        raw_layers.append(r)
        ki += 1
    mlp_packed, mlp_raw = make_mlp_params(kparams[ki], mlp_hiddens[0],
                                          mlp_hiddens[1])

    all_params = dict(kan_layers=packed_layers, mlp=mlp_packed)
    raw_params = dict(kan_layers=raw_layers, mlp=mlp_raw)

    x = 0.6 * jax.random.normal(kx, (batch, layers_hidden[0]), jnp.float32)

    out = kan_mlp_forward(x, all_params)
    out = jax.block_until_ready(out)

    ref = kan_mlp_ref(x, raw_params)
    assert out.shape == (batch, layers_hidden[-1])
    assert jnp.allclose(out, ref, atol=1e-4, rtol=1e-4), (
        f"max abs err {jnp.max(jnp.abs(out - ref))}")

    print("KERNEL_OK")
</pallas_src>

<mosaic_0001>
module attributes {stable_mosaic.version = 11 : i64} {
  func.func @kan_mlp_kernel(%arg0: i32, %arg1: memref<8x16xf32, #tpu.memory_space<vmem>>, %arg2: memref<16x640xf32, #tpu.memory_space<vmem>>, %arg3: memref<1x640xf32, #tpu.memory_space<vmem>>, %arg4: memref<144x32xf32, #tpu.memory_space<vmem>>, %arg5: memref<1x32xf32, #tpu.memory_space<vmem>>, %arg6: memref<32x1280xf32, #tpu.memory_space<vmem>>, %arg7: memref<1x1280xf32, #tpu.memory_space<vmem>>, %arg8: memref<288x32xf32, #tpu.memory_space<vmem>>, %arg9: memref<1x32xf32, #tpu.memory_space<vmem>>, %arg10: memref<32x8xf32, #tpu.memory_space<vmem>>, %arg11: memref<1x8xf32, #tpu.memory_space<vmem>>, %arg12: memref<8x8xf32, #tpu.memory_space<vmem>>) attributes {dimension_semantics = [#tpu.dimension_semantics<parallel>], iteration_bounds = array<i64: 1>, scalar_prefetch = 0 : i64, scratch_operands = 0 : i64, tpu.core_type = #tpu.core_type<tc>, window_params = [{transform_indices = @transform_0, window_bounds = array<i64: 8, 16>}, {pipeline_mode = #tpu.pipeline_mode<synchronous>, transform_indices = @transform_1, window_bounds = array<i64: 16, 640>}, {pipeline_mode = #tpu.pipeline_mode<synchronous>, transform_indices = @transform_2, window_bounds = array<i64: 1, 640>}, {pipeline_mode = #tpu.pipeline_mode<synchronous>, transform_indices = @transform_3, window_bounds = array<i64: 144, 32>}, {pipeline_mode = #tpu.pipeline_mode<synchronous>, transform_indices = @transform_4, window_bounds = array<i64: 1, 32>}, {pipeline_mode = #tpu.pipeline_mode<synchronous>, transform_indices = @transform_5, window_bounds = array<i64: 32, 1280>}, {pipeline_mode = #tpu.pipeline_mode<synchronous>, transform_indices = @transform_6, window_bounds = array<i64: 1, 1280>}, {pipeline_mode = #tpu.pipeline_mode<synchronous>, transform_indices = @transform_7, window_bounds = array<i64: 288, 32>}, {pipeline_mode = #tpu.pipeline_mode<synchronous>, transform_indices = @transform_8, window_bounds = array<i64: 1, 32>}, {pipeline_mode = #tpu.pipeline_mode<synchronous>, transform_indices = @transform_9, window_bounds = array<i64: 32, 8>}, {pipeline_mode = #tpu.pipeline_mode<synchronous>, transform_indices = @transform_10, window_bounds = array<i64: 1, 8>}, {transform_indices = @transform_11, window_bounds = array<i64: 8, 8>}]} {
    %c0 = arith.constant 0 : index
    %c0_0 = arith.constant 0 : index
    %0 = vector.load %arg1[%c0, %c0_0] : memref<8x16xf32, #tpu.memory_space<vmem>>, vector<8x16xf32>
    %c0_1 = arith.constant 0 : index
    %c0_2 = arith.constant 0 : index
    %1 = vector.load %arg2[%c0_1, %c0_2] : memref<16x640xf32, #tpu.memory_space<vmem>>, vector<16x640xf32>
    %cst = arith.constant dense<0.000000e+00> : vector<8x640xf32>
    %2 = tpu.matmul %0, %1, %cst {dimension_numbers = #tpu.dot_dimension_numbers<[1], [0], [0], [1], [0, 0, 1, 1], [], []>} : vector<8x16xf32>, vector<16x640xf32>, vector<8x640xf32> -> vector<8x640xf32>
    %c0_3 = arith.constant 0 : index
    %c0_4 = arith.constant 0 : index
    %3 = vector.load %arg3[%c0_3, %c0_4] : memref<1x640xf32, #tpu.memory_space<vmem>>, vector<1x640xf32>
    %4 = vector.broadcast %3 : vector<1x640xf32> to vector<8x640xf32>
    %5 = arith.subf %2, %4 : vector<8x640xf32>
    %6 = vector.extract_strided_slice %5 {offsets = [0, 0], sizes = [8, 128], strides = [1, 1]} : vector<8x640xf32> to vector<8x128xf32>
    %7 = vector.extract_strided_slice %5 {offsets = [0, 128], sizes = [8, 128], strides = [1, 1]} : vector<8x640xf32> to vector<8x128xf32>
    %8 = vector.extract_strided_slice %5 {offsets = [0, 256], sizes = [8, 128], strides = [1, 1]} : vector<8x640xf32> to vector<8x128xf32>
    %9 = vector.extract_strided_slice %5 {offsets = [0, 384], sizes = [8, 128], strides = [1, 1]} : vector<8x640xf32> to vector<8x128xf32>
    %10 = vector.extract_strided_slice %5 {offsets = [0, 512], sizes = [8, 128], strides = [1, 1]} : vector<8x640xf32> to vector<8x128xf32>
    %cst_5 = arith.constant 0.000000e+00 : f32
    %11 = vector.broadcast %cst_5 : f32 to vector<8x128xf32>
    %12 = arith.cmpf oge, %6, %11 : vector<8x128xf32>
    %cst_6 = arith.constant 0.000000e+00 : f32
    %13 = vector.broadcast %cst_6 : f32 to vector<8x128xf32>
    %14 = arith.cmpf oge, %7, %13 : vector<8x128xf32>
    %cst_7 = arith.constant 0.000000e+00 : f32
    %15 = vector.broadcast %cst_7 : f32 to vector<8x128xf32>
    %16 = arith.cmpf oge, %8, %15 : vector<8x128xf32>
    %cst_8 = arith.constant 0.000000e+00 : f32
    %17 = vector.broadcast %cst_8 : f32 to vector<8x128xf32>
    %18 = arith.cmpf oge, %9, %17 : vector<8x128xf32>
    %cst_9 = arith.constant 0.000000e+00 : f32
    %19 = vector.broadcast %cst_9 : f32 to vector<8x128xf32>
    %20 = arith.cmpf oge, %10, %19 : vector<8x128xf32>
    %cst_10 = arith.constant dense<true> : vector<8x128xi1>
    %21 = arith.xori %14, %cst_10 : vector<8x128xi1>
    %22 = arith.andi %12, %21 : vector<8x128xi1>
    %23 = arith.extui %22 : vector<8x128xi1> to vector<8x128xi32>
    %24 = arith.sitofp %23 : vector<8x128xi32> to vector<8x128xf32>
    %cst_11 = arith.constant dense<true> : vector<8x128xi1>
    %25 = arith.xori %16, %cst_11 : vector<8x128xi1>
    %26 = arith.andi %14, %25 : vector<8x128xi1>
    %27 = arith.extui %26 : vector<8x128xi1> to vector<8x128xi32>
    %28 = arith.sitofp %27 : vector<8x128xi32> to vector<8x128xf32>
    %cst_12 = arith.constant dense<true> : vector<8x128xi1>
    %29 = arith.xori %18, %cst_12 : vector<8x128xi1>
    %30 = arith.andi %16, %29 : vector<8x128xi1>
    %31 = arith.extui %30 : vector<8x128xi1> to vector<8x128xi32>
    %32 = arith.sitofp %31 : vector<8x128xi32> to vector<8x128xf32>
    %cst_13 = arith.constant dense<true> : vector<8x128xi1>
    %33 = arith.xori %20, %cst_13 : vector<8x128xi1>
    %34 = arith.andi %18, %33 : vector<8x128xi1>
    %35 = arith.extui %34 : vector<8x128xi1> to vector<8x128xi32>
    %36 = arith.sitofp %35 : vector<8x128xi32> to vector<8x128xf32>
    %37 = arith.mulf %6, %24 : vector<8x128xf32>
    %38 = arith.mulf %8, %28 : vector<8x128xf32>
    %39 = arith.subf %37, %38 : vector<8x128xf32>
    %40 = arith.mulf %7, %28 : vector<8x128xf32>
    %41 = arith.mulf %9, %32 : vector<8x128xf32>
    %42 = arith.subf %40, %41 : vector<8x128xf32>
    %43 = arith.mulf %8, %32 : vector<8x128xf32>
    %44 = arith.mulf %10, %36 : vector<8x128xf32>
    %45 = arith.subf %43, %44 : vector<8x128xf32>
    %46 = arith.mulf %6, %39 : vector<8x128xf32>
    %47 = arith.mulf %9, %42 : vector<8x128xf32>
    %48 = arith.subf %46, %47 : vector<8x128xf32>
    %49 = arith.mulf %7, %42 : vector<8x128xf32>
    %50 = arith.mulf %10, %45 : vector<8x128xf32>
    %51 = arith.subf %49, %50 : vector<8x128xf32>
    %52 = arith.mulf %6, %48 : vector<8x128xf32>
    %53 = arith.mulf %10, %51 : vector<8x128xf32>
    %54 = arith.subf %52, %53 : vector<8x128xf32>
    %55 = arith.negf %0 : vector<8x16xf32>
    %56 = math.exp %55 : vector<8x16xf32>
    %cst_14 = arith.constant 1.000000e+00 : f32
    %57 = vector.broadcast %cst_14 : f32 to vector<8x16xf32>
    %58 = arith.addf %57, %56 : vector<8x16xf32>
    %59 = arith.divf %57, %58 : vector<8x16xf32>
    %60 = arith.mulf %0, %59 : vector<8x16xf32>
    %61 = tpu.concatenate %54, %60 in 1 : vector<8x128xf32>, vector<8x16xf32> -> vector<8x144xf32>
    %c0_15 = arith.constant 0 : index
    %c0_16 = arith.constant 0 : index
    %62 = vector.load %arg4[%c0_15, %c0_16] : memref<144x32xf32, #tpu.memory_space<vmem>>, vector<144x32xf32>
    %cst_17 = arith.constant dense<0.000000e+00> : vector<8x32xf32>
    %63 = tpu.matmul %61, %62, %cst_17 {dimension_numbers = #tpu.dot_dimension_numbers<[1], [0], [0], [1], [0, 0, 1, 1], [], []>} : vector<8x144xf32>, vector<144x32xf32>, vector<8x32xf32> -> vector<8x32xf32>
    %c0_18 = arith.constant 0 : index
    %c0_19 = arith.constant 0 : index
    %64 = vector.load %arg5[%c0_18, %c0_19] : memref<1x32xf32, #tpu.memory_space<vmem>>, vector<1x32xf32>
    %65 = vector.broadcast %64 : vector<1x32xf32> to vector<8x32xf32>
    %66 = arith.addf %63, %65 : vector<8x32xf32>
    %c0_20 = arith.constant 0 : index
    %c0_21 = arith.constant 0 : index
    %67 = vector.load %arg6[%c0_20, %c0_21] : memref<32x1280xf32, #tpu.memory_space<vmem>>, vector<32x1280xf32>
    %cst_22 = arith.constant dense<0.000000e+00> : vector<8x1280xf32>
    %68 = tpu.matmul %66, %67, %cst_22 {dimension_numbers = #tpu.dot_dimension_numbers<[1], [0], [0], [1], [0, 0, 1, 1], [], []>} : vector<8x32xf32>, vector<32x1280xf32>, vector<8x1280xf32> -> vector<8x1280xf32>
    %c0_23 = arith.constant 0 : index
    %c0_24 = arith.constant 0 : index
    %69 = vector.load %arg7[%c0_23, %c0_24] : memref<1x1280xf32, #tpu.memory_space<vmem>>, vector<1x1280xf32>
    %70 = vector.broadcast %69 : vector<1x1280xf32> to vector<8x1280xf32>
    %71 = arith.subf %68, %70 : vector<8x1280xf32>
    %72 = vector.extract_strided_slice %71 {offsets = [0, 0], sizes = [8, 256], strides = [1, 1]} : vector<8x1280xf32> to vector<8x256xf32>
    %73 = vector.extract_strided_slice %71 {offsets = [0, 256], sizes = [8, 256], strides = [1, 1]} : vector<8x1280xf32> to vector<8x256xf32>
    %74 = vector.extract_strided_slice %71 {offsets = [0, 512], sizes = [8, 256], strides = [1, 1]} : vector<8x1280xf32> to vector<8x256xf32>
    %75 = vector.extract_strided_slice %71 {offsets = [0, 768], sizes = [8, 256], strides = [1, 1]} : vector<8x1280xf32> to vector<8x256xf32>
    %76 = vector.extract_strided_slice %71 {offsets = [0, 1024], sizes = [8, 256], strides = [1, 1]} : vector<8x1280xf32> to vector<8x256xf32>
    %cst_25 = arith.constant 0.000000e+00 : f32
    %77 = vector.broadcast %cst_25 : f32 to vector<8x256xf32>
    %78 = arith.cmpf oge, %72, %77 : vector<8x256xf32>
    %cst_26 = arith.constant 0.000000e+00 : f32
    %79 = vector.broadcast %cst_26 : f32 to vector<8x256xf32>
    %80 = arith.cmpf oge, %73, %79 : vector<8x256xf32>
    %cst_27 = arith.constant 0.000000e+00 : f32
    %81 = vector.broadcast %cst_27 : f32 to vector<8x256xf32>
    %82 = arith.cmpf oge, %74, %81 : vector<8x256xf32>
    %cst_28 = arith.constant 0.000000e+00 : f32
    %83 = vector.broadcast %cst_28 : f32 to vector<8x256xf32>
    %84 = arith.cmpf oge, %75, %83 : vector<8x256xf32>
    %cst_29 = arith.constant 0.000000e+00 : f32
    %85 = vector.broadcast %cst_29 : f32 to vector<8x256xf32>
    %86 = arith.cmpf oge, %76, %85 : vector<8x256xf32>
    %cst_30 = arith.constant dense<true> : vector<8x256xi1>
    %87 = arith.xori %80, %cst_30 : vector<8x256xi1>
    %88 = arith.andi %78, %87 : vector<8x256xi1>
    %89 = arith.extui %88 : vector<8x256xi1> to vector<8x256xi32>
    %90 = arith.sitofp %89 : vector<8x256xi32> to vector<8x256xf32>
    %cst_31 = arith.constant dense<true> : vector<8x256xi1>
    %91 = arith.xori %82, %cst_31 : vector<8x256xi1>
    %92 = arith.andi %80, %91 : vector<8x256xi1>
    %93 = arith.extui %92 : vector<8x256xi1> to vector<8x256xi32>
    %94 = arith.sitofp %93 : vector<8x256xi32> to vector<8x256xf32>
    %cst_32 = arith.constant dense<true> : vector<8x256xi1>
    %95 = arith.xori %84, %cst_32 : vector<8x256xi1>
    %96 = arith.andi %82, %95 : vector<8x256xi1>
    %97 = arith.extui %96 : vector<8x256xi1> to vector<8x256xi32>
    %98 = arith.sitofp %97 : vector<8x256xi32> to vector<8x256xf32>
    %cst_33 = arith.constant dense<true> : vector<8x256xi1>
    %99 = arith.xori %86, %cst_33 : vector<8x256xi1>
    %100 = arith.andi %84, %99 : vector<8x256xi1>
    %101 = arith.extui %100 : vector<8x256xi1> to vector<8x256xi32>
    %102 = arith.sitofp %101 : vector<8x256xi32> to vector<8x256xf32>
    %103 = arith.mulf %72, %90 : vector<8x256xf32>
    %104 = arith.mulf %74, %94 : vector<8x256xf32>
    %105 = arith.subf %103, %104 : vector<8x256xf32>
    %106 = arith.mulf %73, %94 : vector<8x256xf32>
    %107 = arith.mulf %75, %98 : vector<8x256xf32>
    %108 = arith.subf %106, %107 : vector<8x256xf32>
    %109 = arith.mulf %74, %98 : vector<8x256xf32>
    %110 = arith.mulf %76, %102 : vector<8x256xf32>
    %111 = arith.subf %109, %110 : vector<8x256xf32>
    %112 = arith.mulf %72, %105 : vector<8x256xf32>
    %113 = arith.mulf %75, %108 : vector<8x256xf32>
    %114 = arith.subf %112, %113 : vector<8x256xf32>
    %115 = arith.mulf %73, %108 : vector<8x256xf32>
    %116 = arith.mulf %76, %111 : vector<8x256xf32>
    %117 = arith.subf %115, %116 : vector<8x256xf32>
    %118 = arith.mulf %72, %114 : vector<8x256xf32>
    %119 = arith.mulf %76, %117 : vector<8x256xf32>
    %120 = arith.subf %118, %119 : vector<8x256xf32>
    %121 = arith.negf %66 : vector<8x32xf32>
    %122 = math.exp %121 : vector<8x32xf32>
    %cst_34 = arith.constant 1.000000e+00 : f32
    %123 = vector.broadcast %cst_34 : f32 to vector<8x32xf32>
    %124 = arith.addf %123, %122 : vector<8x32xf32>
    %125 = arith.divf %123, %124 : vector<8x32xf32>
    %126 = arith.mulf %66, %125 : vector<8x32xf32>
    %127 = tpu.concatenate %120, %126 in 1 : vector<8x256xf32>, vector<8x32xf32> -> vector<8x288xf32>
    %c0_35 = arith.constant 0 : index
    %c0_36 = arith.constant 0 : index
    %128 = vector.load %arg8[%c0_35, %c0_36] : memref<288x32xf32, #tpu.memory_space<vmem>>, vector<288x32xf32>
    %cst_37 = arith.constant dense<0.000000e+00> : vector<8x32xf32>
    %129 = tpu.matmul %127, %128, %cst_37 {dimension_numbers = #tpu.dot_dimension_numbers<[1], [0], [0], [1], [0, 0, 1, 1], [], []>} : vector<8x288xf32>, vector<288x32xf32>, vector<8x32xf32> -> vector<8x32xf32>
    %c0_38 = arith.constant 0 : index
    %c0_39 = arith.constant 0 : index
    %130 = vector.load %arg9[%c0_38, %c0_39] : memref<1x32xf32, #tpu.memory_space<vmem>>, vector<1x32xf32>
    %131 = vector.broadcast %130 : vector<1x32xf32> to vector<8x32xf32>
    %132 = arith.addf %129, %131 : vector<8x32xf32>
    %c0_40 = arith.constant 0 : index
    %c0_41 = arith.constant 0 : index
    %133 = vector.load %arg10[%c0_40, %c0_41] : memref<32x8xf32, #tpu.memory_space<vmem>>, vector<32x8xf32>
    %cst_42 = arith.constant dense<0.000000e+00> : vector<8x8xf32>
    %134 = tpu.matmul %132, %133, %cst_42 {dimension_numbers = #tpu.dot_dimension_numbers<[1], [0], [0], [1], [0, 0, 1, 1], [], []>} : vector<8x32xf32>, vector<32x8xf32>, vector<8x8xf32> -> vector<8x8xf32>
    %c0_43 = arith.constant 0 : index
    %c0_44 = arith.constant 0 : index
    %135 = vector.load %arg11[%c0_43, %c0_44] : memref<1x8xf32, #tpu.memory_space<vmem>>, vector<1x8xf32>
    %136 = vector.broadcast %135 : vector<1x8xf32> to vector<8x8xf32>
    %137 = arith.addf %134, %136 : vector<8x8xf32>
    %c0_45 = arith.constant 0 : index
    %c0_46 = arith.constant 0 : index
    %138 = vector.load %arg12[%c0_45, %c0_46] : memref<8x8xf32, #tpu.memory_space<vmem>>, vector<8x8xf32>
    tpu.vector_store %arg12[%c0_45, %c0_46], %137 {strides = array<i32>} : memref<8x8xf32, #tpu.memory_space<vmem>>, vector<8x8xf32>,
    return
  }
  func.func @transform_0(%arg0: i32) -> (i32, i32) {
    %c0_i32 = arith.constant 0 : i32
    %c0_i32_0 = arith.constant 0 : i32
    return %arg0, %c0_i32 : i32, i32
  }
  func.func @transform_1(%arg0: i32) -> (i32, i32) {
    %c0_i32 = arith.constant 0 : i32
    %c0_i32_0 = arith.constant 0 : i32
    %c0_i32_1 = arith.constant 0 : i32
    return %c0_i32, %c0_i32_0 : i32, i32
  }
  func.func @transform_2(%arg0: i32) -> (i32, i32) {
    %c0_i32 = arith.constant 0 : i32
    %c0_i32_0 = arith.constant 0 : i32
    %c0_i32_1 = arith.constant 0 : i32
    return %c0_i32, %c0_i32_0 : i32, i32
  }
  func.func @transform_3(%arg0: i32) -> (i32, i32) {
    %c0_i32 = arith.constant 0 : i32
    %c0_i32_0 = arith.constant 0 : i32
    %c0_i32_1 = arith.constant 0 : i32
    return %c0_i32, %c0_i32_0 : i32, i32
  }
  func.func @transform_4(%arg0: i32) -> (i32, i32) {
    %c0_i32 = arith.constant 0 : i32
    %c0_i32_0 = arith.constant 0 : i32
    %c0_i32_1 = arith.constant 0 : i32
    return %c0_i32, %c0_i32_0 : i32, i32
  }
  func.func @transform_5(%arg0: i32) -> (i32, i32) {
    %c0_i32 = arith.constant 0 : i32
    %c0_i32_0 = arith.constant 0 : i32
    %c0_i32_1 = arith.constant 0 : i32
    return %c0_i32, %c0_i32_0 : i32, i32
  }
  func.func @transform_6(%arg0: i32) -> (i32, i32) {
    %c0_i32 = arith.constant 0 : i32
    %c0_i32_0 = arith.constant 0 : i32
    %c0_i32_1 = arith.constant 0 : i32
    return %c0_i32, %c0_i32_0 : i32, i32
  }
  func.func @transform_7(%arg0: i32) -> (i32, i32) {
    %c0_i32 = arith.constant 0 : i32
    %c0_i32_0 = arith.constant 0 : i32
    %c0_i32_1 = arith.constant 0 : i32
    return %c0_i32, %c0_i32_0 : i32, i32
  }
  func.func @transform_8(%arg0: i32) -> (i32, i32) {
    %c0_i32 = arith.constant 0 : i32
    %c0_i32_0 = arith.constant 0 : i32
    %c0_i32_1 = arith.constant 0 : i32
    return %c0_i32, %c0_i32_0 : i32, i32
  }
  func.func @transform_9(%arg0: i32) -> (i32, i32) {
    %c0_i32 = arith.constant 0 : i32
    %c0_i32_0 = arith.constant 0 : i32
    %c0_i32_1 = arith.constant 0 : i32
    return %c0_i32, %c0_i32_0 : i32, i32
  }
  func.func @transform_10(%arg0: i32) -> (i32, i32) {
    %c0_i32 = arith.constant 0 : i32
    %c0_i32_0 = arith.constant 0 : i32
    %c0_i32_1 = arith.constant 0 : i32
    return %c0_i32, %c0_i32_0 : i32, i32
  }
  func.func @transform_11(%arg0: i32) -> (i32, i32) {
    %c0_i32 = arith.constant 0 : i32
    %c0_i32_0 = arith.constant 0 : i32
    return %arg0, %c0_i32 : i32, i32
  }
}

</mosaic_0001>

<llo_original>
// kernel: tpu_custom_call.1
$region0: #{tpu_custom_call.1}
  #allocation0 [shape = 'u32[]', space=smem, size = 0x4, offset = 0x4, fixed_abs, tag = 'smem constant byte address 0x4 - core index']
  #allocation1 [shape = 'u32[144,128]{1,0:T(1,128)}', space=vmem, size = 0x12000, scoped, tag = 'internal scratch']
  %s0 = inlined_call_operand.vmem [shape: f32[8,16], index: 0, kind: input, shape index: {}]
  %s1 = inlined_call_operand.vmem [shape: f32[16,640], index: 1, kind: input, shape index: {}]
  %s2 = inlined_call_operand.vmem [shape: f32[1,640], index: 2, kind: input, shape index: {}]
  %s3 = inlined_call_operand.vmem [shape: f32[144,32], index: 3, kind: input, shape index: {}]
  %s4 = inlined_call_operand.vmem [shape: f32[1,32], index: 4, kind: input, shape index: {}]
  %s5 = inlined_call_operand.vmem [shape: f32[32,1280], index: 5, kind: input, shape index: {}]
  %s6 = inlined_call_operand.vmem [shape: f32[1,1280], index: 6, kind: input, shape index: {}]
  %s7 = inlined_call_operand.vmem [shape: f32[288,32], index: 7, kind: input, shape index: {}]
  %s8 = inlined_call_operand.vmem [shape: f32[1,32], index: 8, kind: input, shape index: {}]
  %s9 = inlined_call_operand.vmem [shape: f32[32,8], index: 9, kind: input, shape index: {}]
  %s10 = inlined_call_operand.vmem [shape: f32[1,8], index: 10, kind: input, shape index: {}]
  %s11 = inlined_call_operand.hbm [shape: f32[8,8], index: 11, kind: output, shape index: {}]
  %s12 = sld [smem:[#allocation0]]
  $region54: #{tpu_custom_call.1} parent=0
    _
  %s14 = ssub.s32 1, %s12
  %s15 = scalar_select 0, %s14, %s12
  $region1: #{tpu_custom_call.1} parent=0
    #allocation2 [shape = 'u8[4096]{0}', space=vmem, size = 0x1000, scoped, tag = 'output window, operand 0, single buffered']
    #allocation3 [shape = 's32[1]{0}', space=sflag, size = 0x4, scoped, tag = 'scoped memory for tpu_custom_call.1']
    %16 = vsyncpa [#allocation3], 0
    // Predicated region
    $region2: #{tpu_custom_call.1} parent=1 // pred_check
      _
    $region3: #{tpu_custom_call.1} parent=1 // pred_check_branch
      %18 = sbr.rel (0) target = $region5
    $region4: #{tpu_custom_call.1} parent=1 // pred_region
      _
    $region5: #{tpu_custom_call.1} parent=1 // pred_fallthru
      _
    // Predicated region
    $region6: #{tpu_custom_call.1} parent=1 // pred_check
      _
    $region7: #{tpu_custom_call.1} parent=1 // pred_check_branch
      %20 = sbr.rel (0) target = $region9
    $region8: #{tpu_custom_call.1} parent=1 // pred_region
      _
    $region9: #{tpu_custom_call.1} parent=1 // pred_fallthru
      _
    // Predicated region
    $region10: #{tpu_custom_call.1} parent=1 // pred_check
      _
    $region11: #{tpu_custom_call.1} parent=1 // pred_check_branch
      %22 = sbr.rel (0) target = $region13
    $region12: #{tpu_custom_call.1} parent=1 // pred_region
      _
    $region13: #{tpu_custom_call.1} parent=1 // pred_fallthru
      _
    // Predicated region
    $region14: #{tpu_custom_call.1} parent=1 // pred_check
      _
    $region15: #{tpu_custom_call.1} parent=1 // pred_check_branch
      %24 = sbr.rel (0) target = $region17
    $region16: #{tpu_custom_call.1} parent=1 // pred_region
      _
    $region17: #{tpu_custom_call.1} parent=1 // pred_fallthru
      _
    // Predicated region
    $region18: #{tpu_custom_call.1} parent=1 // pred_check
      _
    $region19: #{tpu_custom_call.1} parent=1 // pred_check_branch
      %26 = sbr.rel (0) target = $region21
    $region20: #{tpu_custom_call.1} parent=1 // pred_region
      _
    $region21: #{tpu_custom_call.1} parent=1 // pred_fallthru
      _
    // Predicated region
    $region22: #{tpu_custom_call.1} parent=1 // pred_check
      _
    $region23: #{tpu_custom_call.1} parent=1 // pred_check_branch
      %28 = sbr.rel (0) target = $region25
    $region24: #{tpu_custom_call.1} parent=1 // pred_region
      _
    $region25: #{tpu_custom_call.1} parent=1 // pred_fallthru
      _
    // Predicated region
    $region26: #{tpu_custom_call.1} parent=1 // pred_check
      _
    $region27: #{tpu_custom_call.1} parent=1 // pred_check_branch
      %30 = sbr.rel (0) target = $region29
    $region28: #{tpu_custom_call.1} parent=1 // pred_region
      _
    $region29: #{tpu_custom_call.1} parent=1 // pred_fallthru
      _
    // Predicated region
    $region30: #{tpu_custom_call.1} parent=1 // pred_check
      _
    $region31: #{tpu_custom_call.1} parent=1 // pred_check_branch
      %32 = sbr.rel (0) target = $region33
    $region32: #{tpu_custom_call.1} parent=1 // pred_region
      _
    $region33: #{tpu_custom_call.1} parent=1 // pred_fallthru
      _
    // Predicated region
    $region34: #{tpu_custom_call.1} parent=1 // pred_check
      _
    $region35: #{tpu_custom_call.1} parent=1 // pred_check_branch
      %34 = sbr.rel (0) target = $region37
    $region36: #{tpu_custom_call.1} parent=1 // pred_region
      _
    $region37: #{tpu_custom_call.1} parent=1 // pred_fallthru
      _
    // Predicated region
    $region38: #{tpu_custom_call.1} parent=1 // pred_check
      _
    $region39: #{tpu_custom_call.1} parent=1 // pred_check_branch
      %36 = sbr.rel (0) target = $region41
    $region40: #{tpu_custom_call.1} parent=1 // pred_region
      _
    $region41: #{tpu_custom_call.1} parent=1 // pred_fallthru
      _
    // Predicated region
    $region42: #{tpu_custom_call.1} parent=1 // pred_check
      _
    $region43: #{tpu_custom_call.1} parent=1 // pred_check_branch
      %38 = sbr.rel (0) target = $region45
    $region44: #{tpu_custom_call.1} parent=1 // pred_region
      _
    $region45: #{tpu_custom_call.1} parent=1 // pred_fallthru
      _
    %v39 = vld [vmem:[%s0] sm:$0xff]
    %v40 = vld [vmem:[%s1] sm:$0xff]
    %v41 = vld [vmem:[%s1 + $0x8] sm:$0xff]
    %v42 = vld [vmem:[%s1 + $0x10] sm:$0xff]
    %v43 = vld [vmem:[%s1 + $0x18] sm:$0xff]
    %v44 = vld [vmem:[%s1 + $0x20] sm:$0xff]
    %v45 = vld [vmem:[%s1 + $0x28] sm:$0xff]
    %v46 = vld [vmem:[%s1 + $0x30] sm:$0xff]
    %v47 = vld [vmem:[%s1 + $0x38] sm:$0xff]
    %v48 = vld [vmem:[%s1 + $0x40] sm:$0xff]
    %v49 = vld [vmem:[%s1 + $0x48] sm:$0xff]
    %vm50 = vcmask 130048
    %v52 = vsel %vm50, %v39, 0
    %54 = vmatprep.subr.mxu0 0.0
    %55 = vmatpush1.msra.mxu0 0.0
    %56 = vmatprep.subr.mxu0 0.0
    %57 = vmatpush1.msra.mxu0 0.0
    %58 = vmatprep.subr.mxu0 0.0
    %59 = vmatpush1.msra.mxu0 0.0
    %60 = vmatprep.subr.mxu0 0.0
    %61 = vmatpush1.msra.mxu0 0.0
    %62 = vmatprep.subr.mxu0 0.0
    %63 = vmatpush1.msra.mxu0 0.0
    %64 = vmatprep.subr.mxu0 0.0
    %65 = vmatpush1.msra.mxu0 0.0
    %66 = vmatprep.subr.mxu0 0.0
    %67 = vmatpush1.msra.mxu0 0.0
    %68 = vmatprep.subr.mxu0 0.0
    %69 = vmatpush1.msra.mxu0 0.0
    %70 = vmatprep.subr.mxu0 0.0
    %71 = vmatpush1.msra.mxu0 0.0
    %72 = vmatprep.subr.mxu0 0.0
    %73 = vmatpush1.msra.mxu0 0.0
    %74 = vmatprep.subr.mxu0 0.0
    %75 = vmatpush1.msra.mxu0 0.0
    %76 = vmatprep.subr.mxu0 0.0
    %77 = vmatpush1.msra.mxu0 0.0
    %78 = vmatprep.subr.mxu0 0.0
    %79 = vmatpush1.msra.mxu0 0.0
    %80 = vmatprep.subr.mxu0 0.0
    %81 = vmatpush1.msra.mxu0 0.0
    %82 = vmatprep.subr.mxu0 %v46
    %83 = vmatpush1.msra.mxu0 %v45
    %84 = vmatprep.subr.mxu0 %v41
    %85 = vmatpush1.msra.mxu0 %v40
    %86 = vmatprep.subr.mxu0 0.0
    %87 = vmatpush2.msra.mxu0 0.0
    %88 = vmatprep.subr.mxu0 0.0
    %89 = vmatpush2.msra.mxu0 0.0
    %90 = vmatprep.subr.mxu0 0.0
    %91 = vmatpush2.msra.mxu0 0.0
    %92 = vmatprep.subr.mxu0 0.0
    %93 = vmatpush2.msra.mxu0 0.0
    %94 = vmatprep.subr.mxu0 0.0
    %95 = vmatpush2.msra.mxu0 0.0
    %96 = vmatprep.subr.mxu0 0.0
    %97 = vmatpush2.msra.mxu0 0.0
    %98 = vmatprep.subr.mxu0 0.0
    %99 = vmatpush2.msra.mxu0 0.0
    %100 = vmatprep.subr.mxu0 0.0
    %101 = vmatpush2.msra.mxu0 0.0
    %102 = vmatprep.subr.mxu0 0.0
    %103 = vmatpush2.msra.mxu0 0.0
    %104 = vmatprep.subr.mxu0 0.0
    %105 = vmatpush2.msra.mxu0 0.0
    %106 = vmatprep.subr.mxu0 0.0
    %107 = vmatpush2.msra.mxu0 0.0
    %108 = vmatprep.subr.mxu0 0.0
    %109 = vmatpush2.msra.mxu0 0.0
    %110 = vmatprep.subr.mxu0 0.0
    %111 = vmatpush2.msra.mxu0 0.0
    %112 = vmatprep.subr.mxu0 0.0
    %113 = vmatpush2.msra.mxu0 0.0
    %114 = vmatprep.subr.mxu0 0.0
    %115 = vmatpush2.msra.mxu0 0.0
    %116 = vmatprep.subr.mxu0 0.0
    %117 = vmatpush2.msra.mxu0 0.0
    %118 = vmatprep.mubr.f32.mxu0 0.0
    %119 = vmatmul.mubr.f32.gmra.mxu0 %v52
    %v120 = vpop.f32.mrf.mxu0
    %v121 = vadd.f32 0.0, %v120
    %v122 = vpop.f32.mrf.mxu0
    %v123 = vadd.f32 0.0, %v122
    %124 = vdwg.mxu0
    %125 = vmatprep.subr.mxu0 0.0
    %126 = vmatpush1.msra.mxu0 0.0
    %127 = vmatprep.subr.mxu0 0.0
    %128 = vmatpush1.msra.mxu0 0.0
    %129 = vmatprep.subr.mxu0 0.0
    %130 = vmatpush1.msra.mxu0 0.0
    %131 = vmatprep.subr.mxu0 0.0
    %132 = vmatpush1.msra.mxu0 0.0
    %133 = vmatprep.subr.mxu0 0.0
    %134 = vmatpush1.msra.mxu0 0.0
    %135 = vmatprep.subr.mxu0 0.0
    %136 = vmatpush1.msra.mxu0 0.0
    %137 = vmatprep.subr.mxu0 0.0
    %138 = vmatpush1.msra.mxu0 0.0
    %139 = vmatprep.subr.mxu0 0.0
    %140 = vmatpush1.msra.mxu0 0.0
    %141 = vmatprep.subr.mxu0 0.0
    %142 = vmatpush1.msra.mxu0 0.0
    %143 = vmatprep.subr.mxu0 0.0
    %144 = vmatpush1.msra.mxu0 0.0
    %145 = vmatprep.subr.mxu0 0.0
    %146 = vmatpush1.msra.mxu0 0.0
    %147 = vmatprep.subr.mxu0 0.0
    %148 = vmatpush1.msra.mxu0 0.0
    %149 = vmatprep.subr.mxu0 0.0
    %150 = vmatpush1.msra.mxu0 0.0
    %151 = vmatprep.subr.mxu0 0.0
    %152 = vmatpush1.msra.mxu0 0.0
    %153 = vmatprep.subr.mxu0 %v48
    %154 = vmatpush1.msra.mxu0 %v47
    %155 = vmatprep.subr.mxu0 %v43
    %156 = vmatpush1.msra.mxu0 %v42
    %157 = vmatprep.subr.mxu0 0.0
    %158 = vmatpush2.msra.mxu0 0.0
    %159 = vmatprep.subr.mxu0 0.0
    %160 = vmatpush2.msra.mxu0 0.0
    %161 = vmatprep.subr.mxu0 0.0
    %162 = vmatpush2.msra.mxu0 0.0
    %163 = vmatprep.subr.mxu0 0.0
    %164 = vmatpush2.msra.mxu0 0.0
    %165 = vmatprep.subr.mxu0 0.0
    %166 = vmatpush2.msra.mxu0 0.0
    %167 = vmatprep.subr.mxu0 0.0
    %168 = vmatpush2.msra.mxu0 0.0
    %169 = vmatprep.subr.mxu0 0.0
    %170 = vmatpush2.msra.mxu0 0.0
    %171 = vmatprep.subr.mxu0 0.0
    %172 = vmatpush2.msra.mxu0 0.0
    %173 = vmatprep.subr.mxu0 0.0
    %174 = vmatpush2.msra.mxu0 0.0
    %175 = vmatprep.subr.mxu0 0.0
    %176 = vmatpush2.msra.mxu0 0.0
    %177 = vmatprep.subr.mxu0 0.0
    %178 = vmatpush2.msra.mxu0 0.0
    %179 = vmatprep.subr.mxu0 0.0
    %180 = vmatpush2.msra.mxu0 0.0
    %181 = vmatprep.subr.mxu0 0.0
    %182 = vmatpush2.msra.mxu0 0.0
    %183 = vmatprep.subr.mxu0 0.0
    %184 = vmatpush2.msra.mxu0 0.0
    %185 = vmatprep.subr.mxu0 0.0
    %186 = vmatpush2.msra.mxu0 0.0
    %187 = vmatprep.subr.mxu0 0.0
    %188 = vmatpush2.msra.mxu0 0.0
    %189 = vmatprep.mubr.f32.mxu0 0.0
    %190 = vmatmul.mubr.f32.gmra.mxu0 %v52
    %v191 = vpop.f32.mrf.mxu0
    %v192 = vadd.f32 0.0, %v191
    %v193 = vpop.f32.mrf.mxu0
    %v194 = vadd.f32 0.0, %v193
    %195 = vdwg.mxu0
    %196 = vmatprep.subr.mxu0 0.0
    %197 = vmatpush1.msra.mxu0 0.0
    %198 = vmatprep.subr.mxu0 0.0
    %199 = vmatpush1.msra.mxu0 0.0
    %200 = vmatprep.subr.mxu0 0.0
    %201 = vmatpush1.msra.mxu0 0.0
    %202 = vmatprep.subr.mxu0 0.0
    %203 = vmatpush1.msra.mxu0 0.0
    %204 = vmatprep.subr.mxu0 0.0
    %205 = vmatpush1.msra.mxu0 0.0
    %206 = vmatprep.subr.mxu0 0.0
    %207 = vmatpush1.msra.mxu0 0.0
    %208 = vmatprep.subr.mxu0 0.0
    %209 = vmatpush1.msra.mxu0 0.0
    %210 = vmatprep.subr.mxu0 0.0
    %211 = vmatpush1.msra.mxu0 0.0
    %212 = vmatprep.subr.mxu0 0.0
    %213 = vmatpush1.msra.mxu0 0.0
    %214 = vmatprep.subr.mxu0 0.0
    %215 = vmatpush1.msra.mxu0 0.0
    %216 = vmatprep.subr.mxu0 0.0
    %217 = vmatpush1.msra.mxu0 0.0
    %218 = vmatprep.subr.mxu0 0.0
    %219 = vmatpush1.msra.mxu0 0.0
    %220 = vmatprep.subr.mxu0 0.0
    %221 = vmatpush1.msra.mxu0 0.0
    %222 = vmatprep.subr.mxu0 0.0
    %223 = vmatpush1.msra.mxu0 0.0
    %224 = vmatprep.subr.mxu0 0.0
    %225 = vmatpush1.msra.mxu0 %v49
    %226 = vmatprep.subr.mxu0 0.0
    %227 = vmatpush1.msra.mxu0 %v44
    %228 = vmatprep.subr.mxu0 0.0
    %229 = vmatpush2.msra.mxu0 0.0
    %230 = vmatprep.subr.mxu0 0.0
    %231 = vmatpush2.msra.mxu0 0.0
    %232 = vmatprep.subr.mxu0 0.0
    %233 = vmatpush2.msra.mxu0 0.0
    %234 = vmatprep.subr.mxu0 0.0
    %235 = vmatpush2.msra.mxu0 0.0
    %236 = vmatprep.subr.mxu0 0.0
    %237 = vmatpush2.msra.mxu0 0.0
    %238 = vmatprep.subr.mxu0 0.0
    %239 = vmatpush2.msra.mxu0 0.0
    %240 = vmatprep.subr.mxu0 0.0
    %241 = vmatpush2.msra.mxu0 0.0
    %242 = vmatprep.subr.mxu0 0.0
    %243 = vmatpush2.msra.mxu0 0.0
    %244 = vmatprep.subr.mxu0 0.0
    %245 = vmatpush2.msra.mxu0 0.0
    %246 = vmatprep.subr.mxu0 0.0
    %247 = vmatpush2.msra.mxu0 0.0
    %248 = vmatprep.subr.mxu0 0.0
    %249 = vmatpush2.msra.mxu0 0.0
    %250 = vmatprep.subr.mxu0 0.0
    %251 = vmatpush2.msra.mxu0 0.0
    %252 = vmatprep.subr.mxu0 0.0
    %253 = vmatpush2.msra.mxu0 0.0
    %254 = vmatprep.subr.mxu0 0.0
    %255 = vmatpush2.msra.mxu0 0.0
    %256 = vmatprep.subr.mxu0 0.0
    %257 = vmatpush2.msra.mxu0 0.0
    %258 = vmatprep.subr.mxu0 0.0
    %259 = vmatpush2.msra.mxu0 0.0
    %260 = vmatprep.mubr.f32.mxu0 0.0
    %261 = vmatmul.mubr.f32.gmra.mxu0 %v52
    %v262 = vpop.f32.mrf.mxu0
    %v263 = vadd.f32 0.0, %v262
    %v264 = vpop.f32.mrf.mxu0
    %265 = vdwg.mxu0
    %v266 = vld [vmem:[%s2] sm:$0x1f]
    %v268 = vlaneseq
    %v269 = vshrl.u32 %v268, 7
    %v270 = vsub.s32 0, %v269
    %v271 = vrot.slane %v266, %v270
    %v272 = vlaneseq
    %v273 = vshrl.u32 %v272, 7
    %v274 = vsub.s32 1, %v273
    %v275 = vrot.slane %v266, %v274
    %v276 = vlaneseq
    %v277 = vshrl.u32 %v276, 7
    %v278 = vsub.s32 2, %v277
    %v279 = vrot.slane %v266, %v278
    %v280 = vlaneseq
    %v281 = vshrl.u32 %v280, 7
    %v282 = vsub.s32 3, %v281
    %v283 = vrot.slane %v266, %v282
    %v284 = vlaneseq
    %v285 = vshrl.u32 %v284, 7
    %v286 = vsub.s32 4, %v285
    %v287 = vrot.slane %v266, %v286
    %v293 = vsub.f32 %v121, %v271
    %v294 = vsub.f32 %v123, %v275
    %v295 = vsub.f32 %v192, %v279
    %v296 = vsub.f32 %v194, %v283
    %v297 = vsub.f32 %v263, %v287
    %vm298 = vcmp.ge.f32.partialorder %v293, 0.0
    %vm299 = vcmp.ge.f32.partialorder %v294, 0.0
    %vm300 = vcmp.ge.f32.partialorder %v295, 0.0
    %vm301 = vcmp.ge.f32.partialorder %v296, 0.0
    %vm302 = vcmp.ge.f32.partialorder %v297, 0.0
    %vm303 = vmxor %vm299, 1
    %vm304 = vmand %vm298, %vm303
    %v305 = vsel %vm304, 1, 0
    %v306 = vcvt.s32.f32 %v305
    %vm307 = vmxor %vm300, 1
    %vm308 = vmand %vm299, %vm307
    %v309 = vsel %vm308, 1, 0
    %v310 = vcvt.s32.f32 %v309
    %vm311 = vmxor %vm301, 1
    %vm312 = vmand %vm300, %vm311
    %v313 = vsel %vm312, 1, 0
    %v314 = vcvt.s32.f32 %v313
    %vm315 = vmxor %vm302, 1
    %vm316 = vmand %vm301, %vm315
    %v317 = vsel %vm316, 1, 0
    %v318 = vcvt.s32.f32 %v317
    %v319 = vmul.f32 %v293, %v306
    %v320 = vmul.f32 %v295, %v310
    %v321 = vsub.f32 %v319, %v320
    %v322 = vmul.f32 %v294, %v310
    %v323 = vmul.f32 %v296, %v314
    %v324 = vsub.f32 %v322, %v323
    %v325 = vmul.f32 %v295, %v314
    %v326 = vmul.f32 %v297, %v318
    %v327 = vsub.f32 %v325, %v326
    %v328 = vmul.f32 %v293, %v321
    %v329 = vmul.f32 %v296, %v324
    %v330 = vsub.f32 %v328, %v329
    %v331 = vmul.f32 %v294, %v324
    %v332 = vmul.f32 %v297, %v327
    %v333 = vsub.f32 %v331, %v332
    %v334 = vmul.f32 %v293, %v330
    %v335 = vmul.f32 %v297, %v333
    %v336 = vsub.f32 %v334, %v335
    %v337 = vxor.u32 %v39, 2147483648
    %v338 = vmul.f32 %v337, 1.442695
    %v339 = vpow.pop %v338
    %v340 = vadd.f32 %v339, 1.0
    %v341 = vrcp.pop %v340
    %v342 = vmul.f32 1.0, %v341
    %v343 = vmul.f32 %v39, %v342
    %v344 = vld [vmem:[%s3] sm:$0xff]
    %v345 = vld [vmem:[%s3 + $0x8] sm:$0xff]
    %v346 = vld [vmem:[%s3 + $0x10] sm:$0xff]
    %v347 = vld [vmem:[%s3 + $0x18] sm:$0xff]
    %v348 = vld [vmem:[%s3 + $0x20] sm:$0xff]
    %v349 = vld [vmem:[%s3 + $0x28] sm:$0xff]
    %v350 = vld [vmem:[%s3 + $0x30] sm:$0xff]
    %v351 = vld [vmem:[%s3 + $0x38] sm:$0xff]
    %v352 = vld [vmem:[%s3 + $0x40] sm:$0xff]
    %v353 = vld [vmem:[%s3 + $0x48] sm:$0xff]
    %v354 = vld [vmem:[%s3 + $0x50] sm:$0xff]
    %v355 = vld [vmem:[%s3 + $0x58] sm:$0xff]
    %v356 = vld [vmem:[%s3 + $0x60] sm:$0xff]
    %v357 = vld [vmem:[%s3 + $0x68] sm:$0xff]
    %v358 = vld [vmem:[%s3 + $0x70] sm:$0xff]
    %v359 = vld [vmem:[%s3 + $0x78] sm:$0xff]
    %v360 = vld [vmem:[%s3 + $0x80] sm:$0xff]
    %v361 = vld [vmem:[%s3 + $0x88] sm:$0xff]
    %v362 = vld [vmem:[%s4] sm:$0x1]
    %v364 = vlaneseq
    %v365 = vshrl.u32 %v364, 7
    %v366 = vsub.s32 0, %v365
    %v367 = vrot.slane %v362, %v366
    %v370 = vsel %vm50, %v343, 0
    %372 = vmatprep.subr.mxu0 0.0
    %373 = vmatpush1.msra.mxu0 %v359
    %374 = vmatprep.subr.mxu0 0.0
    %375 = vmatpush1.msra.mxu0 %v358
    %376 = vmatprep.subr.mxu0 0.0
    %377 = vmatpush1.msra.mxu0 %v357
    %378 = vmatprep.subr.mxu0 0.0
    %379 = vmatpush1.msra.mxu0 %v356
    %380 = vmatprep.subr.mxu0 0.0
    %381 = vmatpush1.msra.mxu0 %v355
    %382 = vmatprep.subr.mxu0 0.0
    %383 = vmatpush1.msra.mxu0 %v354
    %384 = vmatprep.subr.mxu0 0.0
    %385 = vmatpush1.msra.mxu0 %v353
    %386 = vmatprep.subr.mxu0 0.0
    %387 = vmatpush1.msra.mxu0 %v352
    %388 = vmatprep.subr.mxu0 0.0
    %389 = vmatpush1.msra.mxu0 %v351
    %390 = vmatprep.subr.mxu0 0.0
    %391 = vmatpush1.msra.mxu0 %v350
    %392 = vmatprep.subr.mxu0 0.0
    %393 = vmatpush1.msra.mxu0 %v349
    %394 = vmatprep.subr.mxu0 0.0
    %395 = vmatpush1.msra.mxu0 %v348
    %396 = vmatprep.subr.mxu0 0.0
    %397 = vmatpush1.msra.mxu0 %v347
    %398 = vmatprep.subr.mxu0 0.0
    %399 = vmatpush1.msra.mxu0 %v346
    %400 = vmatprep.subr.mxu0 0.0
    %401 = vmatpush1.msra.mxu0 %v345
    %402 = vmatprep.subr.mxu0 0.0
    %403 = vmatpush1.msra.mxu0 %v344
    %404 = vmatprep.subr.mxu0 0.0
    %405 = vmatpush2.msra.mxu0 0.0
    %406 = vmatprep.subr.mxu0 0.0
    %407 = vmatpush2.msra.mxu0 0.0
    %408 = vmatprep.subr.mxu0 0.0
    %409 = vmatpush2.msra.mxu0 0.0
    %410 = vmatprep.subr.mxu0 0.0
    %411 = vmatpush2.msra.mxu0 0.0
    %412 = vmatprep.subr.mxu0 0.0
    %413 = vmatpush2.msra.mxu0 0.0
    %414 = vmatprep.subr.mxu0 0.0
    %415 = vmatpush2.msra.mxu0 0.0
    %416 = vmatprep.subr.mxu0 0.0
    %417 = vmatpush2.msra.mxu0 0.0
    %418 = vmatprep.subr.mxu0 0.0
    %419 = vmatpush2.msra.mxu0 0.0
    %420 = vmatprep.subr.mxu0 0.0
    %421 = vmatpush2.msra.mxu0 0.0
    %422 = vmatprep.subr.mxu0 0.0
    %423 = vmatpush2.msra.mxu0 0.0
    %424 = vmatprep.subr.mxu0 0.0
    %425 = vmatpush2.msra.mxu0 0.0
    %426 = vmatprep.subr.mxu0 0.0
    %427 = vmatpush2.msra.mxu0 0.0
    %428 = vmatprep.subr.mxu0 0.0
    %429 = vmatpush2.msra.mxu0 0.0
    %430 = vmatprep.subr.mxu0 0.0
    %431 = vmatpush2.msra.mxu0 0.0
    %432 = vmatprep.subr.mxu0 0.0
    %433 = vmatpush2.msra.mxu0 %v361
    %434 = vmatprep.subr.mxu0 0.0
    %435 = vmatpush2.msra.mxu0 %v360
    %436 = vmatprep.mubr.f32.mxu0 %v370
    %437 = vmatmul.mubr.f32.gmra.mxu0 %v336
    %v438 = vpop.f32.mrf.mxu0
    %v439 = vadd.f32 %v367, %v438
    %v440 = vpop.f32.mrf.mxu0
    %441 = vdwg.mxu0
    %v442 = vld [vmem:[%s5] sm:$0xff]
    %v443 = vld [vmem:[%s5 + $0x8] sm:$0xff]
    %v444 = vld [vmem:[%s5 + $0x10] sm:$0xff]
    %v445 = vld [vmem:[%s5 + $0x18] sm:$0xff]
    %v446 = vld [vmem:[%s5 + $0x20] sm:$0xff]
    %v447 = vld [vmem:[%s5 + $0x28] sm:$0xff]
    %v448 = vld [vmem:[%s5 + $0x30] sm:$0xff]
    %v449 = vld [vmem:[%s5 + $0x38] sm:$0xff]
    %v450 = vld [vmem:[%s5 + $0x40] sm:$0xff]
    %v451 = vld [vmem:[%s5 + $0x48] sm:$0xff]
    %v452 = vld [vmem:[%s5 + $0x50] sm:$0xff]
    %v453 = vld [vmem:[%s5 + $0x58] sm:$0xff]
    %v454 = vld [vmem:[%s5 + $0x60] sm:$0xff]
    %v455 = vld [vmem:[%s5 + $0x68] sm:$0xff]
    %v456 = vld [vmem:[%s5 + $0x70] sm:$0xff]
    %v457 = vld [vmem:[%s5 + $0x78] sm:$0xff]
    %v458 = vld [vmem:[%s5 + $0x80] sm:$0xff]
    %v459 = vld [vmem:[%s5 + $0x88] sm:$0xff]
    %v460 = vld [vmem:[%s5 + $0x90] sm:$0xff]
    %v461 = vld [vmem:[%s5 + $0x98] sm:$0xff]
    %v462 = vld [vmem:[%s5 + $0xa0] sm:$0xff]
    %v463 = vld [vmem:[%s5 + $0xa8] sm:$0xff]
    %v464 = vld [vmem:[%s5 + $0xb0] sm:$0xff]
    %v465 = vld [vmem:[%s5 + $0xb8] sm:$0xff]
    %v466 = vld [vmem:[%s5 + $0xc0] sm:$0xff]
    %v467 = vld [vmem:[%s5 + $0xc8] sm:$0xff]
    %v468 = vld [vmem:[%s5 + $0xd0] sm:$0xff]
    %v469 = vld [vmem:[%s5 + $0xd8] sm:$0xff]
    %v470 = vld [vmem:[%s5 + $0xe0] sm:$0xff]
    %v471 = vld [vmem:[%s5 + $0xe8] sm:$0xff]
    %v472 = vld [vmem:[%s5 + $0xf0] sm:$0xff]
    %v473 = vld [vmem:[%s5 + $0xf8] sm:$0xff]
    %v474 = vld [vmem:[%s5 + $0x100] sm:$0xff]
    %v475 = vld [vmem:[%s5 + $0x108] sm:$0xff]
    %v476 = vld [vmem:[%s5 + $0x110] sm:$0xff]
    %v477 = vld [vmem:[%s5 + $0x118] sm:$0xff]
    %v478 = vld [vmem:[%s5 + $0x120] sm:$0xff]
    %v479 = vld [vmem:[%s5 + $0x128] sm:$0xff]
    %v480 = vld [vmem:[%s5 + $0x130] sm:$0xff]
    %v481 = vld [vmem:[%s5 + $0x138] sm:$0xff]
    %vm482 = vcmask 261120
    %v484 = vsel %vm482, %v439, 0
    %486 = vmatprep.subr.mxu0 0.0
    %487 = vmatpush1.msra.mxu0 0.0
    %488 = vmatprep.subr.mxu0 0.0
    %489 = vmatpush1.msra.mxu0 0.0
    %490 = vmatprep.subr.mxu0 0.0
    %491 = vmatpush1.msra.mxu0 0.0
    %492 = vmatprep.subr.mxu0 0.0
    %493 = vmatpush1.msra.mxu0 0.0
    %494 = vmatprep.subr.mxu0 0.0
    %495 = vmatpush1.msra.mxu0 0.0
    %496 = vmatprep.subr.mxu0 0.0
    %497 = vmatpush1.msra.mxu0 0.0
    %498 = vmatprep.subr.mxu0 0.0
    %499 = vmatpush1.msra.mxu0 0.0
    %500 = vmatprep.subr.mxu0 0.0
    %501 = vmatpush1.msra.mxu0 0.0
    %502 = vmatprep.subr.mxu0 0.0
    %503 = vmatpush1.msra.mxu0 0.0
    %504 = vmatprep.subr.mxu0 0.0
    %505 = vmatpush1.msra.mxu0 0.0
    %506 = vmatprep.subr.mxu0 0.0
    %507 = vmatpush1.msra.mxu0 0.0
    %508 = vmatprep.subr.mxu0 0.0
    %509 = vmatpush1.msra.mxu0 0.0
    %510 = vmatprep.subr.mxu0 %v473
    %511 = vmatpush1.msra.mxu0 %v472
    %512 = vmatprep.subr.mxu0 %v463
    %513 = vmatpush1.msra.mxu0 %v462
    %514 = vmatprep.subr.mxu0 %v453
    %515 = vmatpush1.msra.mxu0 %v452
    %516 = vmatprep.subr.mxu0 %v443
    %517 = vmatpush1.msra.mxu0 %v442
    %518 = vmatprep.subr.mxu0 0.0
    %519 = vmatpush2.msra.mxu0 0.0
    %520 = vmatprep.subr.mxu0 0.0
    %521 = vmatpush2.msra.mxu0 0.0
    %522 = vmatprep.subr.mxu0 0.0
    %523 = vmatpush2.msra.mxu0 0.0
    %524 = vmatprep.subr.mxu0 0.0
    %525 = vmatpush2.msra.mxu0 0.0
    %526 = vmatprep.subr.mxu0 0.0
    %527 = vmatpush2.msra.mxu0 0.0
    %528 = vmatprep.subr.mxu0 0.0
    %529 = vmatpush2.msra.mxu0 0.0
    %530 = vmatprep.subr.mxu0 0.0
    %531 = vmatpush2.msra.mxu0 0.0
    %532 = vmatprep.subr.mxu0 0.0
    %533 = vmatpush2.msra.mxu0 0.0
    %534 = vmatprep.subr.mxu0 0.0
    %535 = vmatpush2.msra.mxu0 0.0
    %536 = vmatprep.subr.mxu0 0.0
    %537 = vmatpush2.msra.mxu0 0.0
    %538 = vmatprep.subr.mxu0 0.0
    %539 = vmatpush2.msra.mxu0 0.0
    %540 = vmatprep.subr.mxu0 0.0
    %541 = vmatpush2.msra.mxu0 0.0
    %542 = vmatprep.subr.mxu0 0.0
    %543 = vmatpush2.msra.mxu0 0.0
    %544 = vmatprep.subr.mxu0 0.0
    %545 = vmatpush2.msra.mxu0 0.0
    %546 = vmatprep.subr.mxu0 0.0
    %547 = vmatpush2.msra.mxu0 0.0
    %548 = vmatprep.subr.mxu0 0.0
    %549 = vmatpush2.msra.mxu0 0.0
    %550 = vmatprep.mubr.f32.mxu0 0.0
    %551 = vmatmul.mubr.f32.gmra.mxu0 %v484
    %v552 = vpop.f32.mrf.mxu0
    %v553 = vadd.f32 0.0, %v552
    %v554 = vpop.f32.mrf.mxu0
    %v555 = vadd.f32 0.0, %v554
    %556 = vdwg.mxu0
    %557 = vmatprep.subr.mxu0 0.0
    %558 = vmatpush1.msra.mxu0 0.0
    %559 = vmatprep.subr.mxu0 0.0
    %560 = vmatpush1.msra.mxu0 0.0
    %561 = vmatprep.subr.mxu0 0.0
    %562 = vmatpush1.msra.mxu0 0.0
    %563 = vmatprep.subr.mxu0 0.0
    %564 = vmatpush1.msra.mxu0 0.0
    %565 = vmatprep.subr.mxu0 0.0
    %566 = vmatpush1.msra.mxu0 0.0
    %567 = vmatprep.subr.mxu0 0.0
    %568 = vmatpush1.msra.mxu0 0.0
    %569 = vmatprep.subr.mxu0 0.0
    %570 = vmatpush1.msra.mxu0 0.0
    %571 = vmatprep.subr.mxu0 0.0
    %572 = vmatpush1.msra.mxu0 0.0
    %573 = vmatprep.subr.mxu0 0.0
    %574 = vmatpush1.msra.mxu0 0.0
    %575 = vmatprep.subr.mxu0 0.0
    %576 = vmatpush1.msra.mxu0 0.0
    %577 = vmatprep.subr.mxu0 0.0
    %578 = vmatpush1.msra.mxu0 0.0
    %579 = vmatprep.subr.mxu0 0.0
    %580 = vmatpush1.msra.mxu0 0.0
    %581 = vmatprep.subr.mxu0 %v475
    %582 = vmatpush1.msra.mxu0 %v474
    %583 = vmatprep.subr.mxu0 %v465
    %584 = vmatpush1.msra.mxu0 %v464
    %585 = vmatprep.subr.mxu0 %v455
    %586 = vmatpush1.msra.mxu0 %v454
    %587 = vmatprep.subr.mxu0 %v445
    %588 = vmatpush1.msra.mxu0 %v444
    %589 = vmatprep.subr.mxu0 0.0
    %590 = vmatpush2.msra.mxu0 0.0
    %591 = vmatprep.subr.mxu0 0.0
    %592 = vmatpush2.msra.mxu0 0.0
    %593 = vmatprep.subr.mxu0 0.0
    %594 = vmatpush2.msra.mxu0 0.0
    %595 = vmatprep.subr.mxu0 0.0
    %596 = vmatpush2.msra.mxu0 0.0
    %597 = vmatprep.subr.mxu0 0.0
    %598 = vmatpush2.msra.mxu0 0.0
    %599 = vmatprep.subr.mxu0 0.0
    %600 = vmatpush2.msra.mxu0 0.0
    %601 = vmatprep.subr.mxu0 0.0
    %602 = vmatpush2.msra.mxu0 0.0
    %603 = vmatprep.subr.mxu0 0.0
    %604 = vmatpush2.msra.mxu0 0.0
    %605 = vmatprep.subr.mxu0 0.0
    %606 = vmatpush2.msra.mxu0 0.0
    %607 = vmatprep.subr.mxu0 0.0
    %608 = vmatpush2.msra.mxu0 0.0
    %609 = vmatprep.subr.mxu0 0.0
    %610 = vmatpush2.msra.mxu0 0.0
    %611 = vmatprep.subr.mxu0 0.0
    %612 = vmatpush2.msra.mxu0 0.0
    %613 = vmatprep.subr.mxu0 0.0
    %614 = vmatpush2.msra.mxu0 0.0
    %615 = vmatprep.subr.mxu0 0.0
    %616 = vmatpush2.msra.mxu0 0.0
    %617 = vmatprep.subr.mxu0 0.0
    %618 = vmatpush2.msra.mxu0 0.0
    %619 = vmatprep.subr.mxu0 0.0
    %620 = vmatpush2.msra.mxu0 0.0
    %621 = vmatprep.mubr.f32.mxu0 0.0
    %622 = vmatmul.mubr.f32.gmra.mxu0 %v484
    %v623 = vpop.f32.mrf.mxu0
    %v624 = vadd.f32 0.0, %v623
    %v625 = vpop.f32.mrf.mxu0
    %v626 = vadd.f32 0.0, %v625
    %627 = vdwg.mxu0
    %628 = vmatprep.subr.mxu0 0.0
    %629 = vmatpush1.msra.mxu0 0.0
    %630 = vmatprep.subr.mxu0 0.0
    %631 = vmatpush1.msra.mxu0 0.0
    %632 = vmatprep.subr.mxu0 0.0
    %633 = vmatpush1.msra.mxu0 0.0
    %634 = vmatprep.subr.mxu0 0.0
    %635 = vmatpush1.msra.mxu0 0.0
    %636 = vmatprep.subr.mxu0 0.0
    %637 = vmatpush1.msra.mxu0 0.0
    %638 = vmatprep.subr.mxu0 0.0
    %639 = vmatpush1.msra.mxu0 0.0
    %640 = vmatprep.subr.mxu0 0.0
    %641 = vmatpush1.msra.mxu0 0.0
    %642 = vmatprep.subr.mxu0 0.0
    %643 = vmatpush1.msra.mxu0 0.0
    %644 = vmatprep.subr.mxu0 0.0
    %645 = vmatpush1.msra.mxu0 0.0
    %646 = vmatprep.subr.mxu0 0.0
    %647 = vmatpush1.msra.mxu0 0.0
    %648 = vmatprep.subr.mxu0 0.0
    %649 = vmatpush1.msra.mxu0 0.0
    %650 = vmatprep.subr.mxu0 0.0
    %651 = vmatpush1.msra.mxu0 0.0
    %652 = vmatprep.subr.mxu0 %v477
    %653 = vmatpush1.msra.mxu0 %v476
    %654 = vmatprep.subr.mxu0 %v467
    %655 = vmatpush1.msra.mxu0 %v466
    %656 = vmatprep.subr.mxu0 %v457
    %657 = vmatpush1.msra.mxu0 %v456
    %658 = vmatprep.subr.mxu0 %v447
    %659 = vmatpush1.msra.mxu0 %v446
    %660 = vmatprep.subr.mxu0 0.0
    %661 = vmatpush2.msra.mxu0 0.0
    %662 = vmatprep.subr.mxu0 0.0
    %663 = vmatpush2.msra.mxu0 0.0
    %664 = vmatprep.subr.mxu0 0.0
    %665 = vmatpush2.msra.mxu0 0.0
    %666 = vmatprep.subr.mxu0 0.0
    %667 = vmatpush2.msra.mxu0 0.0
    %668 = vmatprep.subr.mxu0 0.0
    %669 = vmatpush2.msra.mxu0 0.0
    %670 = vmatprep.subr.mxu0 0.0
    %671 = vmatpush2.msra.mxu0 0.0
    %672 = vmatprep.subr.mxu0 0.0
    %673 = vmatpush2.msra.mxu0 0.0
    %674 = vmatprep.subr.mxu0 0.0
    %675 = vmatpush2.msra.mxu0 0.0
    %676 = vmatprep.subr.mxu0 0.0
    %677 = vmatpush2.msra.mxu0 0.0
    %678 = vmatprep.subr.mxu0 0.0
    %679 = vmatpush2.msra.mxu0 0.0
    %680 = vmatprep.subr.mxu0 0.0
    %681 = vmatpush2.msra.mxu0 0.0
    %682 = vmatprep.subr.mxu0 0.0
    %683 = vmatpush2.msra.mxu0 0.0
    %684 = vmatprep.subr.mxu0 0.0
    %685 = vmatpush2.msra.mxu0 0.0
    %686 = vmatprep.subr.mxu0 0.0
    %687 = vmatpush2.msra.mxu0 0.0
    %688 = vmatprep.subr.mxu0 0.0
    %689 = vmatpush2.msra.mxu0 0.0
    %690 = vmatprep.subr.mxu0 0.0
    %691 = vmatpush2.msra.mxu0 0.0
    %692 = vmatprep.mubr.f32.mxu0 0.0
    %693 = vmatmul.mubr.f32.gmra.mxu0 %v484
    %v694 = vpop.f32.mrf.mxu0
    %v695 = vadd.f32 0.0, %v694
    %v696 = vpop.f32.mrf.mxu0
    %v697 = vadd.f32 0.0, %v696
    %698 = vdwg.mxu0
    %699 = vmatprep.subr.mxu0 0.0
    %700 = vmatpush1.msra.mxu0 0.0
    %701 = vmatprep.subr.mxu0 0.0
    %702 = vmatpush1.msra.mxu0 0.0
    %703 = vmatprep.subr.mxu0 0.0
    %704 = vmatpush1.msra.mxu0 0.0
    %705 = vmatprep.subr.mxu0 0.0
    %706 = vmatpush1.msra.mxu0 0.0
    %707 = vmatprep.subr.mxu0 0.0
    %708 = vmatpush1.msra.mxu0 0.0
    %709 = vmatprep.subr.mxu0 0.0
    %710 = vmatpush1.msra.mxu0 0.0
    %711 = vmatprep.subr.mxu0 0.0
    %712 = vmatpush1.msra.mxu0 0.0
    %713 = vmatprep.subr.mxu0 0.0
    %714 = vmatpush1.msra.mxu0 0.0
    %715 = vmatprep.subr.mxu0 0.0
    %716 = vmatpush1.msra.mxu0 0.0
    %717 = vmatprep.subr.mxu0 0.0
    %718 = vmatpush1.msra.mxu0 0.0
    %719 = vmatprep.subr.mxu0 0.0
    %720 = vmatpush1.msra.mxu0 0.0
    %721 = vmatprep.subr.mxu0 0.0
    %722 = vmatpush1.msra.mxu0 0.0
    %723 = vmatprep.subr.mxu0 %v479
    %724 = vmatpush1.msra.mxu0 %v478
    %725 = vmatprep.subr.mxu0 %v469
    %726 = vmatpush1.msra.mxu0 %v468
    %727 = vmatprep.subr.mxu0 %v459
    %728 = vmatpush1.msra.mxu0 %v458
    %729 = vmatprep.subr.mxu0 %v449
    %730 = vmatpush1.msra.mxu0 %v448
    %731 = vmatprep.subr.mxu0 0.0
    %732 = vmatpush2.msra.mxu0 0.0
    %733 = vmatprep.subr.mxu0 0.0
    %734 = vmatpush2.msra.mxu0 0.0
    %735 = vmatprep.subr.mxu0 0.0
    %736 = vmatpush2.msra.mxu0 0.0
    %737 = vmatprep.subr.mxu0 0.0
    %738 = vmatpush2.msra.mxu0 0.0
    %739 = vmatprep.subr.mxu0 0.0
    %740 = vmatpush2.msra.mxu0 0.0
    %741 = vmatprep.subr.mxu0 0.0
    %742 = vmatpush2.msra.mxu0 0.0
    %743 = vmatprep.subr.mxu0 0.0
    %744 = vmatpush2.msra.mxu0 0.0
    %745 = vmatprep.subr.mxu0 0.0
    %746 = vmatpush2.msra.mxu0 0.0
    %747 = vmatprep.subr.mxu0 0.0
    %748 = vmatpush2.msra.mxu0 0.0
    %749 = vmatprep.subr.mxu0 0.0
    %750 = vmatpush2.msra.mxu0 0.0
    %751 = vmatprep.subr.mxu0 0.0
    %752 = vmatpush2.msra.mxu0 0.0
    %753 = vmatprep.subr.mxu0 0.0
    %754 = vmatpush2.msra.mxu0 0.0
    %755 = vmatprep.subr.mxu0 0.0
    %756 = vmatpush2.msra.mxu0 0.0
    %757 = vmatprep.subr.mxu0 0.0
    %758 = vmatpush2.msra.mxu0 0.0
    %759 = vmatprep.subr.mxu0 0.0
    %760 = vmatpush2.msra.mxu0 0.0
    %761 = vmatprep.subr.mxu0 0.0
    %762 = vmatpush2.msra.mxu0 0.0
    %763 = vmatprep.mubr.f32.mxu0 0.0
    %764 = vmatmul.mubr.f32.gmra.mxu0 %v484
    %v765 = vpop.f32.mrf.mxu0
    %v766 = vadd.f32 0.0, %v765
    %v767 = vpop.f32.mrf.mxu0
    %v768 = vadd.f32 0.0, %v767
    %769 = vdwg.mxu0
    %770 = vmatprep.subr.mxu0 0.0
    %771 = vmatpush1.msra.mxu0 0.0
    %772 = vmatprep.subr.mxu0 0.0
    %773 = vmatpush1.msra.mxu0 0.0
    %774 = vmatprep.subr.mxu0 0.0
    %775 = vmatpush1.msra.mxu0 0.0
    %776 = vmatprep.subr.mxu0 0.0
    %777 = vmatpush1.msra.mxu0 0.0
    %778 = vmatprep.subr.mxu0 0.0
    %779 = vmatpush1.msra.mxu0 0.0
    %780 = vmatprep.subr.mxu0 0.0
    %781 = vmatpush1.msra.mxu0 0.0
    %782 = vmatprep.subr.mxu0 0.0
    %783 = vmatpush1.msra.mxu0 0.0
    %784 = vmatprep.subr.mxu0 0.0
    %785 = vmatpush1.msra.mxu0 0.0
    %786 = vmatprep.subr.mxu0 0.0
    %787 = vmatpush1.msra.mxu0 0.0
    %788 = vmatprep.subr.mxu0 0.0
    %789 = vmatpush1.msra.mxu0 0.0
    %790 = vmatprep.subr.mxu0 0.0
    %791 = vmatpush1.msra.mxu0 0.0
    %792 = vmatprep.subr.mxu0 0.0
    %793 = vmatpush1.msra.mxu0 0.0
    %794 = vmatprep.subr.mxu0 %v481
    %795 = vmatpush1.msra.mxu0 %v480
    %796 = vmatprep.subr.mxu0 %v471
    %797 = vmatpush1.msra.mxu0 %v470
    %798 = vmatprep.subr.mxu0 %v461
    %799 = vmatpush1.msra.mxu0 %v460
    %800 = vmatprep.subr.mxu0 %v451
    %801 = vmatpush1.msra.mxu0 %v450
    %802 = vmatprep.subr.mxu0 0.0
    %803 = vmatpush2.msra.mxu0 0.0
    %804 = vmatprep.subr.mxu0 0.0
    %805 = vmatpush2.msra.mxu0 0.0
    %806 = vmatprep.subr.mxu0 0.0
    %807 = vmatpush2.msra.mxu0 0.0
    %808 = vmatprep.subr.mxu0 0.0
    %809 = vmatpush2.msra.mxu0 0.0
    %810 = vmatprep.subr.mxu0 0.0
    %811 = vmatpush2.msra.mxu0 0.0
    %812 = vmatprep.subr.mxu0 0.0
    %813 = vmatpush2.msra.mxu0 0.0
    %814 = vmatprep.subr.mxu0 0.0
    %815 = vmatpush2.msra.mxu0 0.0
    %816 = vmatprep.subr.mxu0 0.0
    %817 = vmatpush2.msra.mxu0 0.0
    %818 = vmatprep.subr.mxu0 0.0
    %819 = vmatpush2.msra.mxu0 0.0
    %820 = vmatprep.subr.mxu0 0.0
    %821 = vmatpush2.msra.mxu0 0.0
    %822 = vmatprep.subr.mxu0 0.0
    %823 = vmatpush2.msra.mxu0 0.0
    %824 = vmatprep.subr.mxu0 0.0
    %825 = vmatpush2.msra.mxu0 0.0
    %826 = vmatprep.subr.mxu0 0.0
    %827 = vmatpush2.msra.mxu0 0.0
    %828 = vmatprep.subr.mxu0 0.0
    %829 = vmatpush2.msra.mxu0 0.0
    %830 = vmatprep.subr.mxu0 0.0
    %831 = vmatpush2.msra.mxu0 0.0
    %832 = vmatprep.subr.mxu0 0.0
    %833 = vmatpush2.msra.mxu0 0.0
    %834 = vmatprep.mubr.f32.mxu0 0.0
    %835 = vmatmul.mubr.f32.gmra.mxu0 %v484
    %v836 = vpop.f32.mrf.mxu0
    %v837 = vadd.f32 0.0, %v836
    %v838 = vpop.f32.mrf.mxu0
    %v839 = vadd.f32 0.0, %v838
    %840 = vdwg.mxu0
    %v841 = vld [vmem:[%s6] sm:$0xff]
    %v842 = vld [vmem:[%s6 + $0x8] sm:$0x3]
    %v845 = vlaneseq
    %v846 = vshrl.u32 %v845, 7
    %v847 = vsub.s32 0, %v846
    %v848 = vrot.slane %v841, %v847
    %v849 = vlaneseq
    %v850 = vshrl.u32 %v849, 7
    %v851 = vsub.s32 1, %v850
    %v852 = vrot.slane %v841, %v851
    %v853 = vlaneseq
    %v854 = vshrl.u32 %v853, 7
    %v855 = vsub.s32 2, %v854
    %v856 = vrot.slane %v841, %v855
    %v857 = vlaneseq
    %v858 = vshrl.u32 %v857, 7
    %v859 = vsub.s32 3, %v858
    %v860 = vrot.slane %v841, %v859
    %v861 = vlaneseq
    %v862 = vshrl.u32 %v861, 7
    %v863 = vsub.s32 4, %v862
    %v864 = vrot.slane %v841, %v863
    %v865 = vlaneseq
    %v866 = vshrl.u32 %v865, 7
    %v867 = vsub.s32 5, %v866
    %v868 = vrot.slane %v841, %v867
    %v869 = vlaneseq
    %v870 = vshrl.u32 %v869, 7
    %v871 = vsub.s32 6, %v870
    %v872 = vrot.slane %v841, %v871
    %v873 = vlaneseq
    %v874 = vshrl.u32 %v873, 7
    %v875 = vsub.s32 7, %v874
    %v876 = vrot.slane %v841, %v875
    %v877 = vlaneseq
    %v878 = vshrl.u32 %v877, 7
    %v879 = vsub.s32 0, %v878
    %v880 = vrot.slane %v842, %v879
    %v881 = vlaneseq
    %v882 = vshrl.u32 %v881, 7
    %v883 = vsub.s32 1, %v882
    %v884 = vrot.slane %v842, %v883
    %v895 = vsub.f32 %v553, %v848
    %v896 = vsub.f32 %v555, %v852
    %v897 = vsub.f32 %v624, %v856
    %v898 = vsub.f32 %v626, %v860
    %v899 = vsub.f32 %v695, %v864
    %v900 = vsub.f32 %v697, %v868
    %v901 = vsub.f32 %v766, %v872
    %v902 = vsub.f32 %v768, %v876
    %v903 = vsub.f32 %v837, %v880
    %v904 = vsub.f32 %v839, %v884
    %vm905 = vcmp.ge.f32.partialorder %v895, 0.0
    %vm906 = vcmp.ge.f32.partialorder %v896, 0.0
    %vm907 = vcmp.ge.f32.partialorder %v897, 0.0
    %vm908 = vcmp.ge.f32.partialorder %v898, 0.0
    %vm909 = vcmp.ge.f32.partialorder %v899, 0.0
    %vm910 = vcmp.ge.f32.partialorder %v900, 0.0
    %vm911 = vcmp.ge.f32.partialorder %v901, 0.0
    %vm912 = vcmp.ge.f32.partialorder %v902, 0.0
    %vm913 = vcmp.ge.f32.partialorder %v903, 0.0
    %vm914 = vcmp.ge.f32.partialorder %v904, 0.0
    %vm915 = vmxor %vm907, 1
    %vm916 = vmxor %vm908, 1
    %vm917 = vmand %vm905, %vm915
    %vm918 = vmand %vm906, %vm916
    %v919 = vsel %vm917, 1, 0
    %v920 = vsel %vm918, 1, 0
    %v921 = vcvt.s32.f32 %v919
    %v922 = vcvt.s32.f32 %v920
    %vm923 = vmxor %vm909, 1
    %vm924 = vmxor %vm910, 1
    %vm925 = vmand %vm907, %vm923
    %vm926 = vmand %vm908, %vm924
    %v927 = vsel %vm925, 1, 0
    %v928 = vsel %vm926, 1, 0
    %v929 = vcvt.s32.f32 %v927
    %v930 = vcvt.s32.f32 %v928
    %vm931 = vmxor %vm911, 1
    %vm932 = vmxor %vm912, 1
    %vm933 = vmand %vm909, %vm931
    %vm934 = vmand %vm910, %vm932
    %v935 = vsel %vm933, 1, 0
    %v936 = vsel %vm934, 1, 0
    %v937 = vcvt.s32.f32 %v935
    %v938 = vcvt.s32.f32 %v936
    %vm939 = vmxor %vm913, 1
    %vm940 = vmxor %vm914, 1
    %vm941 = vmand %vm911, %vm939
    %vm942 = vmand %vm912, %vm940
    %v943 = vsel %vm941, 1, 0
    %v944 = vsel %vm942, 1, 0
    %v945 = vcvt.s32.f32 %v943
    %v946 = vcvt.s32.f32 %v944
    %v947 = vmul.f32 %v895, %v921
    %v948 = vmul.f32 %v896, %v922
    %v949 = vmul.f32 %v899, %v929
    %v950 = vmul.f32 %v900, %v930
    %v951 = vsub.f32 %v947, %v949
    %v952 = vsub.f32 %v948, %v950
    %v953 = vmul.f32 %v897, %v929
    %v954 = vmul.f32 %v898, %v930
    %v955 = vmul.f32 %v901, %v937
    %v956 = vmul.f32 %v902, %v938
    %v957 = vsub.f32 %v953, %v955
    %v958 = vsub.f32 %v954, %v956
    %v959 = vmul.f32 %v899, %v937
    %v960 = vmul.f32 %v900, %v938
    %v961 = vmul.f32 %v903, %v945
    %v962 = vmul.f32 %v904, %v946
    %v963 = vsub.f32 %v959, %v961
    %v964 = vsub.f32 %v960, %v962
    %v965 = vmul.f32 %v895, %v951
    %v966 = vmul.f32 %v896, %v952
    %v967 = vmul.f32 %v901, %v957
    %v968 = vmul.f32 %v902, %v958
    %v969 = vsub.f32 %v965, %v967
    %v970 = vsub.f32 %v966, %v968
    %v971 = vmul.f32 %v897, %v957
    %v972 = vmul.f32 %v898, %v958
    %v973 = vmul.f32 %v903, %v963
    %v974 = vmul.f32 %v904, %v964
    %v975 = vsub.f32 %v971, %v973
    %v976 = vsub.f32 %v972, %v974
    %v977 = vmul.f32 %v895, %v969
    %v978 = vmul.f32 %v896, %v970
    %v979 = vmul.f32 %v903, %v975
    %v980 = vmul.f32 %v904, %v976
    %v981 = vsub.f32 %v977, %v979
    %v982 = vsub.f32 %v978, %v980
    %v983 = vxor.u32 %v439, 2147483648
    %v984 = vmul.f32 %v983, 1.442695
    %v985 = vpow.pop %v984
    %v986 = vadd.f32 %v985, 1.0
    %v987 = vrcp.pop %v986
    %v988 = vmul.f32 1.0, %v987
    %v989 = vmul.f32 %v439, %v988
    %v990 = vld [vmem:[%s7] sm:$0xff]
    %v991 = vld [vmem:[%s7 + $0x8] sm:$0xff]
    %v992 = vld [vmem:[%s7 + $0x10] sm:$0xff]
    %v993 = vld [vmem:[%s7 + $0x18] sm:$0xff]
    %v994 = vld [vmem:[%s7 + $0x20] sm:$0xff]
    %v995 = vld [vmem:[%s7 + $0x28] sm:$0xff]
    %v996 = vld [vmem:[%s7 + $0x30] sm:$0xff]
    %v997 = vld [vmem:[%s7 + $0x38] sm:$0xff]
    %v998 = vld [vmem:[%s7 + $0x40] sm:$0xff]
    %v999 = vld [vmem:[%s7 + $0x48] sm:$0xff]
    %v1000 = vld [vmem:[%s7 + $0x50] sm:$0xff]
    %v1001 = vld [vmem:[%s7 + $0x58] sm:$0xff]
    %v1002 = vld [vmem:[%s7 + $0x60] sm:$0xff]
    %v1003 = vld [vmem:[%s7 + $0x68] sm:$0xff]
    %v1004 = vld [vmem:[%s7 + $0x70] sm:$0xff]
    %v1005 = vld [vmem:[%s7 + $0x78] sm:$0xff]
    %v1006 = vld [vmem:[%s7 + $0x80] sm:$0xff]
    %v1007 = vld [vmem:[%s7 + $0x88] sm:$0xff]
    %v1008 = vld [vmem:[%s7 + $0x90] sm:$0xff]
    %v1009 = vld [vmem:[%s7 + $0x98] sm:$0xff]
    %v1010 = vld [vmem:[%s7 + $0xa0] sm:$0xff]
    %v1011 = vld [vmem:[%s7 + $0xa8] sm:$0xff]
    %v1012 = vld [vmem:[%s7 + $0xb0] sm:$0xff]
    %v1013 = vld [vmem:[%s7 + $0xb8] sm:$0xff]
    %v1014 = vld [vmem:[%s7 + $0xc0] sm:$0xff]
    %v1015 = vld [vmem:[%s7 + $0xc8] sm:$0xff]
    %v1016 = vld [vmem:[%s7 + $0xd0] sm:$0xff]
    %v1017 = vld [vmem:[%s7 + $0xd8] sm:$0xff]
    %v1018 = vld [vmem:[%s7 + $0xe0] sm:$0xff]
    %v1019 = vld [vmem:[%s7 + $0xe8] sm:$0xff]
    %v1020 = vld [vmem:[%s7 + $0xf0] sm:$0xff]
    %v1021 = vld [vmem:[%s7 + $0xf8] sm:$0xff]
    %v1022 = vld [vmem:[%s7 + $0x100] sm:$0xff]
    %v1023 = vld [vmem:[%s7 + $0x108] sm:$0xff]
    %v1024 = vld [vmem:[%s7 + $0x110] sm:$0xff]
    %v1025 = vld [vmem:[%s7 + $0x118] sm:$0xff]
    %v1026 = vld [vmem:[%s8] sm:$0x1]
    %v1028 = vlaneseq
    %v1029 = vshrl.u32 %v1028, 7
    %v1030 = vsub.s32 0, %v1029
    %v1031 = vrot.slane %v1026, %v1030
    %v1034 = vsel %vm482, %v989, 0
    %1036 = vmatprep.subr.mxu0 0.0
    %1037 = vmatpush1.msra.mxu0 %v1005
    %1038 = vmatprep.subr.mxu0 0.0
    %1039 = vmatpush1.msra.mxu0 %v1004
    %1040 = vmatprep.subr.mxu0 0.0
    %1041 = vmatpush1.msra.mxu0 %v1003
    %1042 = vmatprep.subr.mxu0 0.0
    %1043 = vmatpush1.msra.mxu0 %v1002
    %1044 = vmatprep.subr.mxu0 0.0
    %1045 = vmatpush1.msra.mxu0 %v1001
    %1046 = vmatprep.subr.mxu0 0.0
    %1047 = vmatpush1.msra.mxu0 %v1000
    %1048 = vmatprep.subr.mxu0 0.0
    %1049 = vmatpush1.msra.mxu0 %v999
    %1050 = vmatprep.subr.mxu0 0.0
    %1051 = vmatpush1.msra.mxu0 %v998
    %1052 = vmatprep.subr.mxu0 0.0
    %1053 = vmatpush1.msra.mxu0 %v997
    %1054 = vmatprep.subr.mxu0 0.0
    %1055 = vmatpush1.msra.mxu0 %v996
    %1056 = vmatprep.subr.mxu0 0.0
    %1057 = vmatpush1.msra.mxu0 %v995
    %1058 = vmatprep.subr.mxu0 0.0
    %1059 = vmatpush1.msra.mxu0 %v994
    %1060 = vmatprep.subr.mxu0 0.0
    %1061 = vmatpush1.msra.mxu0 %v993
    %1062 = vmatprep.subr.mxu0 0.0
    %1063 = vmatpush1.msra.mxu0 %v992
    %1064 = vmatprep.subr.mxu0 0.0
    %1065 = vmatpush1.msra.mxu0 %v991
    %1066 = vmatprep.subr.mxu0 0.0
    %1067 = vmatpush1.msra.mxu0 %v990
    %1068 = vmatprep.subr.mxu0 0.0
    %1069 = vmatpush2.msra.mxu0 %v1021
    %1070 = vmatprep.subr.mxu0 0.0
    %1071 = vmatpush2.msra.mxu0 %v1020
    %1072 = vmatprep.subr.mxu0 0.0
    %1073 = vmatpush2.msra.mxu0 %v1019
    %1074 = vmatprep.subr.mxu0 0.0
    %1075 = vmatpush2.msra.mxu0 %v1018
    %1076 = vmatprep.subr.mxu0 0.0
    %1077 = vmatpush2.msra.mxu0 %v1017
    %1078 = vmatprep.subr.mxu0 0.0
    %1079 = vmatpush2.msra.mxu0 %v1016
    %1080 = vmatprep.subr.mxu0 0.0
    %1081 = vmatpush2.msra.mxu0 %v1015
    %1082 = vmatprep.subr.mxu0 0.0
    %1083 = vmatpush2.msra.mxu0 %v1014
    %1084 = vmatprep.subr.mxu0 0.0
    %1085 = vmatpush2.msra.mxu0 %v1013
    %1086 = vmatprep.subr.mxu0 0.0
    %1087 = vmatpush2.msra.mxu0 %v1012
    %1088 = vmatprep.subr.mxu0 0.0
    %1089 = vmatpush2.msra.mxu0 %v1011
    %1090 = vmatprep.subr.mxu0 0.0
    %1091 = vmatpush2.msra.mxu0 %v1010
    %1092 = vmatprep.subr.mxu0 0.0
    %1093 = vmatpush2.msra.mxu0 %v1009
    %1094 = vmatprep.subr.mxu0 0.0
    %1095 = vmatpush2.msra.mxu0 %v1008
    %1096 = vmatprep.subr.mxu0 0.0
    %1097 = vmatpush2.msra.mxu0 %v1007
    %1098 = vmatprep.subr.mxu0 0.0
    %1099 = vmatpush2.msra.mxu0 %v1006
    %1100 = vmatprep.mubr.f32.mxu0 %v982
    %1101 = vmatmul.mubr.f32.gmra.mxu0 %v981
    %v1102 = vpop.f32.mrf.mxu0
    %v1103 = vadd.f32 %v1031, %v1102
    %v1104 = vpop.f32.mrf.mxu0
    %1105 = vdwg.mxu0
    %1106 = vmatprep.subr.mxu0 0.0
    %1107 = vmatpush1.msra.mxu0 0.0
    %1108 = vmatprep.subr.mxu0 0.0
    %1109 = vmatpush1.msra.mxu0 0.0
    %1110 = vmatprep.subr.mxu0 0.0
    %1111 = vmatpush1.msra.mxu0 0.0
    %1112 = vmatprep.subr.mxu0 0.0
    %1113 = vmatpush1.msra.mxu0 0.0
    %1114 = vmatprep.subr.mxu0 0.0
    %1115 = vmatpush1.msra.mxu0 0.0
    %1116 = vmatprep.subr.mxu0 0.0
    %1117 = vmatpush1.msra.mxu0 0.0
    %1118 = vmatprep.subr.mxu0 0.0
    %1119 = vmatpush1.msra.mxu0 0.0
    %1120 = vmatprep.subr.mxu0 0.0
    %1121 = vmatpush1.msra.mxu0 0.0
    %1122 = vmatprep.subr.mxu0 0.0
    %1123 = vmatpush1.msra.mxu0 0.0
    %1124 = vmatprep.subr.mxu0 0.0
    %1125 = vmatpush1.msra.mxu0 0.0
    %1126 = vmatprep.subr.mxu0 0.0
    %1127 = vmatpush1.msra.mxu0 0.0
    %1128 = vmatprep.subr.mxu0 0.0
    %1129 = vmatpush1.msra.mxu0 0.0
    %1130 = vmatprep.subr.mxu0 0.0
    %1131 = vmatpush1.msra.mxu0 %v1025
    %1132 = vmatprep.subr.mxu0 0.0
    %1133 = vmatpush1.msra.mxu0 %v1024
    %1134 = vmatprep.subr.mxu0 0.0
    %1135 = vmatpush1.msra.mxu0 %v1023
    %1136 = vmatprep.subr.mxu0 0.0
    %1137 = vmatpush1.msra.mxu0 %v1022
    %1138 = vmatprep.subr.mxu0 0.0
    %1139 = vmatpush2.msra.mxu0 0.0
    %1140 = vmatprep.subr.mxu0 0.0
    %1141 = vmatpush2.msra.mxu0 0.0
    %1142 = vmatprep.subr.mxu0 0.0
    %1143 = vmatpush2.msra.mxu0 0.0
    %1144 = vmatprep.subr.mxu0 0.0
    %1145 = vmatpush2.msra.mxu0 0.0
    %1146 = vmatprep.subr.mxu0 0.0
    %1147 = vmatpush2.msra.mxu0 0.0
    %1148 = vmatprep.subr.mxu0 0.0
    %1149 = vmatpush2.msra.mxu0 0.0
    %1150 = vmatprep.subr.mxu0 0.0
    %1151 = vmatpush2.msra.mxu0 0.0
    %1152 = vmatprep.subr.mxu0 0.0
    %1153 = vmatpush2.msra.mxu0 0.0
    %1154 = vmatprep.subr.mxu0 0.0
    %1155 = vmatpush2.msra.mxu0 0.0
    %1156 = vmatprep.subr.mxu0 0.0
    %1157 = vmatpush2.msra.mxu0 0.0
    %1158 = vmatprep.subr.mxu0 0.0
    %1159 = vmatpush2.msra.mxu0 0.0
    %1160 = vmatprep.subr.mxu0 0.0
    %1161 = vmatpush2.msra.mxu0 0.0
    %1162 = vmatprep.subr.mxu0 0.0
    %1163 = vmatpush2.msra.mxu0 0.0
    %1164 = vmatprep.subr.mxu0 0.0
    %1165 = vmatpush2.msra.mxu0 0.0
    %1166 = vmatprep.subr.mxu0 0.0
    %1167 = vmatpush2.msra.mxu0 0.0
    %1168 = vmatprep.subr.mxu0 0.0
    %1169 = vmatpush2.msra.mxu0 0.0
    %1170 = vmatprep.mubr.f32.mxu0 0.0
    %1171 = vmatmul.mubr.f32.gmra.mxu0 %v1034
    %v1172 = vpop.f32.mrf.mxu0
    %v1173 = vadd.f32 %v1103, %v1172
    %v1174 = vpop.f32.mrf.mxu0
    %1175 = vdwg.mxu0
    %v1176 = vld [vmem:[%s9] sm:$0xff]
    %v1177 = vld [vmem:[%s9 + $0x8] sm:$0xff]
    %v1178 = vld [vmem:[%s9 + $0x10] sm:$0xff]
    %v1179 = vld [vmem:[%s9 + $0x18] sm:$0xff]
    %v1180 = vld [vmem:[%s10] sm:$0x1]
    %v1182 = vlaneseq
    %v1183 = vshrl.u32 %v1182, 7
    %v1184 = vsub.s32 0, %v1183
    %v1185 = vrot.slane %v1180, %v1184
    %v1188 = vsel %vm482, %v1173, 0
    %1190 = vmatprep.subr.mxu0 0.0
    %1191 = vmatpush1.msra.mxu0 0.0
    %1192 = vmatprep.subr.mxu0 0.0
    %1193 = vmatpush1.msra.mxu0 0.0
    %1194 = vmatprep.subr.mxu0 0.0
    %1195 = vmatpush1.msra.mxu0 0.0
    %1196 = vmatprep.subr.mxu0 0.0
    %1197 = vmatpush1.msra.mxu0 0.0
    %1198 = vmatprep.subr.mxu0 0.0
    %1199 = vmatpush1.msra.mxu0 0.0
    %1200 = vmatprep.subr.mxu0 0.0
    %1201 = vmatpush1.msra.mxu0 0.0
    %1202 = vmatprep.subr.mxu0 0.0
    %1203 = vmatpush1.msra.mxu0 0.0
    %1204 = vmatprep.subr.mxu0 0.0
    %1205 = vmatpush1.msra.mxu0 0.0
    %1206 = vmatprep.subr.mxu0 0.0
    %1207 = vmatpush1.msra.mxu0 0.0
    %1208 = vmatprep.subr.mxu0 0.0
    %1209 = vmatpush1.msra.mxu0 0.0
    %1210 = vmatprep.subr.mxu0 0.0
    %1211 = vmatpush1.msra.mxu0 0.0
    %1212 = vmatprep.subr.mxu0 0.0
    %1213 = vmatpush1.msra.mxu0 0.0
    %1214 = vmatprep.subr.mxu0 0.0
    %1215 = vmatpush1.msra.mxu0 %v1179
    %1216 = vmatprep.subr.mxu0 0.0
    %1217 = vmatpush1.msra.mxu0 %v1178
    %1218 = vmatprep.subr.mxu0 0.0
    %1219 = vmatpush1.msra.mxu0 %v1177
    %1220 = vmatprep.subr.mxu0 0.0
    %1221 = vmatpush1.msra.mxu0 %v1176
    %1222 = vmatprep.subr.mxu0 0.0
    %1223 = vmatpush2.msra.mxu0 0.0
    %1224 = vmatprep.subr.mxu0 0.0
    %1225 = vmatpush2.msra.mxu0 0.0
    %1226 = vmatprep.subr.mxu0 0.0
    %1227 = vmatpush2.msra.mxu0 0.0
    %1228 = vmatprep.subr.mxu0 0.0
    %1229 = vmatpush2.msra.mxu0 0.0
    %1230 = vmatprep.subr.mxu0 0.0
    %1231 = vmatpush2.msra.mxu0 0.0
    %1232 = vmatprep.subr.mxu0 0.0
    %1233 = vmatpush2.msra.mxu0 0.0
    %1234 = vmatprep.subr.mxu0 0.0
    %1235 = vmatpush2.msra.mxu0 0.0
    %1236 = vmatprep.subr.mxu0 0.0
    %1237 = vmatpush2.msra.mxu0 0.0
    %1238 = vmatprep.subr.mxu0 0.0
    %1239 = vmatpush2.msra.mxu0 0.0
    %1240 = vmatprep.subr.mxu0 0.0
    %1241 = vmatpush2.msra.mxu0 0.0
    %1242 = vmatprep.subr.mxu0 0.0
    %1243 = vmatpush2.msra.mxu0 0.0
    %1244 = vmatprep.subr.mxu0 0.0
    %1245 = vmatpush2.msra.mxu0 0.0
    %1246 = vmatprep.subr.mxu0 0.0
    %1247 = vmatpush2.msra.mxu0 0.0
    %1248 = vmatprep.subr.mxu0 0.0
    %1249 = vmatpush2.msra.mxu0 0.0
    %1250 = vmatprep.subr.mxu0 0.0
    %1251 = vmatpush2.msra.mxu0 0.0
    %1252 = vmatprep.subr.mxu0 0.0
    %1253 = vmatpush2.msra.mxu0 0.0
    %1254 = vmatprep.mubr.f32.mxu0 0.0
    %1255 = vmatmul.mubr.f32.gmra.mxu0 %v1188
    %v1256 = vpop.f32.mrf.mxu0
    %v1257 = vadd.f32 %v1185, %v1256
    %v1258 = vpop.f32.mrf.mxu0
    %1259 = vdwg.mxu0
    %vm1260 = vcmask 64512
    %1261 = vst.msk [vmem:[#allocation2] sm:$0xff] %vm1260, %v1257
    // Predicated region
    $region46: #{tpu_custom_call.1} parent=1 // pred_check
      _
    $region47: #{tpu_custom_call.1} parent=1 // pred_check_branch
      %1263 = sbr.rel (0) target = $region49
    $region48: #{tpu_custom_call.1} parent=1 // pred_region
      %s1265 = ssub.s32 128, 128
      %1266 = vsyncadd [#allocation3], %s1265
      %s1268 = sshll.u32 [#allocation2], 4
      %s1269 = int_to_ptr.vmem [resolvable:$true] %s1268
      %1271 = dma.vmem_to_hbm [thread:$0]  %s1269, 128, %s11, [#allocation3]
    $region49: #{tpu_custom_call.1} parent=1 // pred_fallthru
      _
    // Predicated region
    $region50: #{tpu_custom_call.1} parent=1 // pred_check
      _
    $region51: #{tpu_custom_call.1} parent=1 // pred_check_branch
      %1273 = sbr.rel (0) target = $region53
    $region52: #{tpu_custom_call.1} parent=1 // pred_region
      %1274 = dma.done [#allocation3], 128
    $region53: #{tpu_custom_call.1} parent=1 // pred_fallthru
      _
    %1275 = vsyncpa [#allocation3], 1

</llo_original>
